<compile_context>
chip_gen: v5e
topology: v5e:2x2
jax: 0.10.0
libtpu: 0.0.40
codegen_flags: <defaults>
</compile_context>

<pallas_src>
import functools

import jax
import jax.numpy as jnp
import numpy as np
from jax.experimental import pallas as pl
from jax.experimental.pallas import tpu as pltpu


def _up_concat_kernel(x_ref, w_ref, b_ref, pe_ref, po_ref, d_ref, o_ref,
                      *, cd, t_h, compute_dtype):
    # x_ref : (1, Cin, t_h, t_w)        input tile (NCHW)
    # w_ref : (2, 2, Cout, Cin)         w_ref[kh, kw, co, ci] = W[ci, co, kh, kw]
    # b_ref : (Cout, 1)                 f32 bias
    # pe_ref: (t_w, 2*t_w)              Pe[w, 2w]   = 1  (kw == 0 lane spreader)
    # po_ref: (t_w, 2*t_w)              Po[w, 2w+1] = 1  (kw == 1 lane spreader)
    # d_ref : (1, Cd, 2*t_h, 2*t_w)     skip-connection tile
    # o_ref : (1, Cd+Cout, 2*t_h, 2*t_w) fused concat output tile

    # ---- fused channel concat: skip connection -> channels [0:Cd] ----------
    o_ref[0, :cd, :, :] = d_ref[0].astype(o_ref.dtype)

    # ---- operands resident for the whole block ------------------------------
    pe = pe_ref[...]
    po = po_ref[...]
    bias = b_ref[...]                              # (Cout, 1), f32
    w00 = w_ref[0, 0]                              # (Cout, Cin)
    w01 = w_ref[0, 1]
    w10 = w_ref[1, 0]
    w11 = w_ref[1, 1]

    # ---- transposed conv, one input row at a time ---------------------------
    for h in range(t_h):                           # static unroll (t_h <= 32)
        xr = x_ref[0, :, h, :]                     # (Cin, t_w)
        if compute_dtype is not None:
            # in-kernel cast: no extra HBM read/write pass over x
            xr = xr.astype(compute_dtype)
        # y_khkw[co, w] = sum_ci W[ci, co, kh, kw] * x[ci, h, w]
        y00 = jnp.dot(w00, xr, preferred_element_type=jnp.float32)
        y01 = jnp.dot(w01, xr, preferred_element_type=jnp.float32)
        y10 = jnp.dot(w10, xr, preferred_element_type=jnp.float32)
        y11 = jnp.dot(w11, xr, preferred_element_type=jnp.float32)
        # kw lane interleave on the MXU (exact: Pe/Po are 0/1 matrices):
        #   row_kh[co, 2w+kw] = y_khkw[co, w] + b[co]
        r0 = (jnp.dot(y00, pe, preferred_element_type=jnp.float32)
              + jnp.dot(y01, po, preferred_element_type=jnp.float32) + bias)
        r1 = (jnp.dot(y10, pe, preferred_element_type=jnp.float32)
              + jnp.dot(y11, po, preferred_element_type=jnp.float32) + bias)
        # kh interleave is free: rows 2h / 2h+1 of the final NCHW layout,
        # each written as one contiguous lane-dense (Cout, 2*t_w) store.
        o_ref[0, cd:, 2 * h, :] = r0.astype(o_ref.dtype)
        o_ref[0, cd:, 2 * h + 1, :] = r1.astype(o_ref.dtype)


def _vmem_capacity_bytes():
    try:
        return int(pltpu.get_tpu_info().vmem_capacity_bytes)
    except Exception:
        return 64 * 1024 * 1024        # conservative (v7x-sized) fallback


def _select_tiles(cin, cout, cd, h, w, x_item, o_item, w_item):
    """Pick (t_h, t_w) that exactly divide (H, W), satisfy the TPU layout rules
    (second-minor % 8 == 0 or full, minor % 128 == 0 or full) and maximise the
    block size inside a generation-aware VMEM budget."""
    cap = _vmem_capacity_bytes()
    budget = int(cap * 0.7)            # headroom for Mosaic internal scratch
    c_total = cd + cout

    th_cands = [d for d in range(1, h + 1)
                if h % d == 0 and (d % 8 == 0 or d == h) and d <= 32]
    tw_cands = [d for d in range(1, w + 1)
                if w % d == 0 and (d % 128 == 0 or d == w) and d <= 512]
    if not th_cands:
        th_cands = [h]
    if not tw_cands:
        tw_cands = [w]

    resident = 2 * (4 * cout * cin * w_item + cout * 4)    # weight + bias (x2 buffers)

    def footprint(th, tw):
        x_b = cin * th * tw * x_item
        d_b = cd * (2 * th) * (2 * tw) * o_item
        o_b = c_total * (2 * th) * (2 * tw) * o_item
        p_b = 2 * tw * (2 * tw) * 4                         # Pe + Po (f32)
        return 2 * (x_b + d_b + o_b + p_b) + resident

    fitting, fallback = [], []
    for th in th_cands:
        for tw in tw_cands:
            fp = footprint(th, tw)
            (fitting if fp <= budget else fallback).append((th * tw, -fp, th, tw, fp))
    if fitting:
        _, _, t_h, t_w, fp = max(fitting)          # biggest block that fits
    else:
        _, _, t_h, t_w, fp = max(fallback, key=lambda e: e[1])   # smallest footprint
    vmem_limit = int(min(cap, max(fp + (8 << 20), 32 << 20)))
    return t_h, t_w, vmem_limit


def up_concat(inputs, down_outputs, weight, bias, *, compute_dtype=None):
    """inputs: (N, Cin, H, W); down_outputs: (N, Cd, 2H, 2W);
    weight: (Cin, Cout, 2, 2) (ConvTranspose2d layout); bias: (Cout,).
    Returns cat([down_outputs, deconv(inputs)], channel) -> (N, Cd+Cout, 2H, 2W)."""
    n, cin, h, w = inputs.shape
    nd, cd, h2, w2 = down_outputs.shape
    cin_w, cout, kh, kw = weight.shape
    assert cin_w == cin and kh == 2 and kw == 2
    assert nd == n and h2 == 2 * h and w2 == 2 * w
    c_total = cd + cout
    out_dtype = inputs.dtype

    # (Cin, Cout, 2, 2) -> (2, 2, Cout, Cin); tiny, negligible cost.
    w4 = jnp.transpose(weight, (2, 3, 1, 0))
    if compute_dtype is not None:
        w4 = w4.astype(compute_dtype)              # only the tiny weight is cast here
    b2 = bias.astype(jnp.float32).reshape(cout, 1)
    down = down_outputs.astype(out_dtype)

    x_item = jnp.dtype(inputs.dtype).itemsize
    o_item = jnp.dtype(out_dtype).itemsize
    w_item = jnp.dtype(w4.dtype).itemsize
    t_h, t_w, vmem_limit = _select_tiles(cin, cout, cd, h, w, x_item, o_item, w_item)

    # Constant 0/1 lane-spreading matrices: Pe[w, 2w] = 1, Po[w, 2w+1] = 1.
    cols = jnp.arange(2 * t_w)[None, :]
    rows = jnp.arange(t_w)[:, None]
    pe = (cols == 2 * rows).astype(jnp.float32)
    po = (cols == 2 * rows + 1).astype(jnp.float32)

    grid = (n, h // t_h, w // t_w)
    kernel = functools.partial(_up_concat_kernel, cd=cd, t_h=t_h,
                               compute_dtype=compute_dtype)

    flops = 8 * n * h * w * cin * cout + 16 * n * h * w * cout * t_w
    bytes_accessed = (inputs.size * x_item + down.size * o_item
                      + w4.size * w_item + b2.size * 4 + pe.size * 4 + po.size * 4
                      + n * c_total * (2 * h) * (2 * w) * o_item)

    return pl.pallas_call(
        kernel,
        out_shape=jax.ShapeDtypeStruct((n, c_total, 2 * h, 2 * w), out_dtype),
        grid_spec=pltpu.PrefetchScalarGridSpec(
            num_scalar_prefetch=0,
            grid=grid,
            in_specs=[
                pl.BlockSpec((1, cin, t_h, t_w), lambda ni, ri, ci: (ni, 0, ri, ci)),
                pl.BlockSpec((2, 2, cout, cin), lambda ni, ri, ci: (0, 0, 0, 0)),
                pl.BlockSpec((cout, 1), lambda ni, ri, ci: (0, 0)),
                pl.BlockSpec((t_w, 2 * t_w), lambda ni, ri, ci: (0, 0)),
                pl.BlockSpec((t_w, 2 * t_w), lambda ni, ri, ci: (0, 0)),
                pl.BlockSpec((1, cd, 2 * t_h, 2 * t_w),
                             lambda ni, ri, ci: (ni, 0, ri, ci)),
            ],
            out_specs=pl.BlockSpec((1, c_total, 2 * t_h, 2 * t_w),
                                   lambda ni, ri, ci: (ni, 0, ri, ci)),
        ),
        compiler_params=pltpu.CompilerParams(
            dimension_semantics=("parallel", "parallel", "parallel"),
            vmem_limit_bytes=vmem_limit,
        ),
        cost_estimate=pl.CostEstimate(
            flops=int(flops), transcendentals=0, bytes_accessed=int(bytes_accessed)),
    )(inputs, w4, b2, pe, po, down)


def _reference(inputs, down_outputs, weight, bias):
    """Pure-JAX reference for ConvTranspose2d(k=2, s=2) + channel concat."""
    n, cin, h, w = inputs.shape
    cout = weight.shape[1]
    y = jnp.einsum("nihw,iojk->nohjwk", inputs, weight)
    y = y.reshape(n, cout, 2 * h, 2 * w) + bias[None, :, None, None]
    return jnp.concatenate([down_outputs, y], axis=1)


if __name__ == "__main__":
    key = jax.random.PRNGKey(0)
    k1, k2, k3, k4 = jax.random.split(key, 4)

    # Small shapes consistent with the module: in_feat=8, out_feat=4.
    N, Cin, H, W = 2, 8, 8, 8
    Cout = 4
    Cd = 4  # skip-connection channels

    inputs = jax.random.normal(k1, (N, Cin, H, W), dtype=jnp.float32)
    down_outputs = jax.random.normal(k2, (N, Cd, 2 * H, 2 * W), dtype=jnp.float32)
    # ConvTranspose2d weight: (in_channels, out_channels, kH, kW); bias: (out_channels,)
    weight = 0.1 * jax.random.normal(k3, (Cin, Cout, 2, 2), dtype=jnp.float32)
    bias = 0.1 * jax.random.normal(k4, (Cout,), dtype=jnp.float32)

    fn = jax.jit(up_concat, static_argnames=("compute_dtype",))
    out = jax.block_until_ready(fn(inputs, down_outputs, weight, bias))

    ref = jax.block_until_ready(_reference(inputs, down_outputs, weight, bias))
    assert out.shape == (N, Cd + Cout, 2 * H, 2 * W), out.shape
    np.testing.assert_allclose(np.asarray(out), np.asarray(ref), rtol=1e-5, atol=1e-5)

    print("KERNEL_OK")
</pallas_src>

<mosaic_0001>
module attributes {stable_mosaic.version = 11 : i64} {
  func.func @_up_concat_kernel(%arg0: i32, %arg1: i32, %arg2: i32, %arg3: memref<1x8x8x8xf32, #tpu.memory_space<vmem>>, %arg4: memref<2x2x4x8xf32, #tpu.memory_space<vmem>>, %arg5: memref<4x1xf32, #tpu.memory_space<vmem>>, %arg6: memref<8x16xf32, #tpu.memory_space<vmem>>, %arg7: memref<8x16xf32, #tpu.memory_space<vmem>>, %arg8: memref<1x4x16x16xf32, #tpu.memory_space<vmem>>, %arg9: memref<1x8x16x16xf32, #tpu.memory_space<vmem>>) attributes {dimension_semantics = [#tpu.dimension_semantics<parallel>, #tpu.dimension_semantics<parallel>, #tpu.dimension_semantics<parallel>], iteration_bounds = array<i64: 2, 1, 1>, scalar_prefetch = 0 : i64, scratch_operands = 0 : i64, tpu.core_type = #tpu.core_type<tc>, window_params = [{transform_indices = @transform_0, window_bounds = array<i64: 1, 8, 8, 8>}, {pipeline_mode = #tpu.pipeline_mode<synchronous>, transform_indices = @transform_1, window_bounds = array<i64: 2, 2, 4, 8>}, {pipeline_mode = #tpu.pipeline_mode<synchronous>, transform_indices = @transform_2, window_bounds = array<i64: 4, 1>}, {pipeline_mode = #tpu.pipeline_mode<synchronous>, transform_indices = @transform_3, window_bounds = array<i64: 8, 16>}, {pipeline_mode = #tpu.pipeline_mode<synchronous>, transform_indices = @transform_4, window_bounds = array<i64: 8, 16>}, {transform_indices = @transform_5, window_bounds = array<i64: 1, 4, 16, 16>}, {transform_indices = @transform_6, window_bounds = array<i64: 1, 8, 16, 16>}]} {
    %c0 = arith.constant 0 : index
    %c0_0 = arith.constant 0 : index
    %c0_1 = arith.constant 0 : index
    %c0_2 = arith.constant 0 : index
    %0 = vector.load %arg8[%c0, %c0_0, %c0_1, %c0_2] : memref<1x4x16x16xf32, #tpu.memory_space<vmem>>, vector<1x4x16x16xf32>
    %1 = vector.shape_cast %0 : vector<1x4x16x16xf32> to vector<4x16x16xf32>
    %c0_3 = arith.constant 0 : index
    %c0_4 = arith.constant 0 : index
    %c0_5 = arith.constant 0 : index
    %c0_6 = arith.constant 0 : index
    %2 = vector.load %arg9[%c0_3, %c0_4, %c0_5, %c0_6] : memref<1x8x16x16xf32, #tpu.memory_space<vmem>>, vector<1x4x16x16xf32>
    %3 = vector.shape_cast %2 : vector<1x4x16x16xf32> to vector<4x16x16xf32>
    %4 = vector.shape_cast %1 : vector<4x16x16xf32> to vector<1x4x16x16xf32>
    tpu.vector_store %arg9[%c0_3, %c0_4, %c0_5, %c0_6], %4 {strides = array<i32>} : memref<1x8x16x16xf32, #tpu.memory_space<vmem>>, vector<1x4x16x16xf32>,
    %c0_7 = arith.constant 0 : index
    %c0_8 = arith.constant 0 : index
    %5 = vector.load %arg6[%c0_7, %c0_8] : memref<8x16xf32, #tpu.memory_space<vmem>>, vector<8x16xf32>
    %c0_9 = arith.constant 0 : index
    %c0_10 = arith.constant 0 : index
    %6 = vector.load %arg7[%c0_9, %c0_10] : memref<8x16xf32, #tpu.memory_space<vmem>>, vector<8x16xf32>
    %c0_11 = arith.constant 0 : index
    %c0_12 = arith.constant 0 : index
    %7 = vector.load %arg5[%c0_11, %c0_12] : memref<4x1xf32, #tpu.memory_space<vmem>>, vector<4x1xf32>
    %c0_13 = arith.constant 0 : index
    %c0_14 = arith.constant 0 : index
    %c0_15 = arith.constant 0 : index
    %c0_16 = arith.constant 0 : index
    %8 = vector.load %arg4[%c0_13, %c0_14, %c0_15, %c0_16] : memref<2x2x4x8xf32, #tpu.memory_space<vmem>>, vector<1x1x4x8xf32>
    %9 = vector.shape_cast %8 : vector<1x1x4x8xf32> to vector<4x8xf32>
    %c0_17 = arith.constant 0 : index
    %c1 = arith.constant 1 : index
    %c0_18 = arith.constant 0 : index
    %c0_19 = arith.constant 0 : index
    %10 = vector.load %arg4[%c0_17, %c1, %c0_18, %c0_19] : memref<2x2x4x8xf32, #tpu.memory_space<vmem>>, vector<1x1x4x8xf32>
    %11 = vector.shape_cast %10 : vector<1x1x4x8xf32> to vector<4x8xf32>
    %c1_20 = arith.constant 1 : index
    %c0_21 = arith.constant 0 : index
    %c0_22 = arith.constant 0 : index
    %c0_23 = arith.constant 0 : index
    %12 = vector.load %arg4[%c1_20, %c0_21, %c0_22, %c0_23] : memref<2x2x4x8xf32, #tpu.memory_space<vmem>>, vector<1x1x4x8xf32>
    %13 = vector.shape_cast %12 : vector<1x1x4x8xf32> to vector<4x8xf32>
    %c1_24 = arith.constant 1 : index
    %c1_25 = arith.constant 1 : index
    %c0_26 = arith.constant 0 : index
    %c0_27 = arith.constant 0 : index
    %14 = vector.load %arg4[%c1_24, %c1_25, %c0_26, %c0_27] : memref<2x2x4x8xf32, #tpu.memory_space<vmem>>, vector<1x1x4x8xf32>
    %15 = vector.shape_cast %14 : vector<1x1x4x8xf32> to vector<4x8xf32>
    %c0_28 = arith.constant 0 : index
    %c0_29 = arith.constant 0 : index
    %c0_30 = arith.constant 0 : index
    %c0_31 = arith.constant 0 : index
    %16 = vector.load %arg3[%c0_28, %c0_29, %c0_30, %c0_31] : memref<1x8x8x8xf32, #tpu.memory_space<vmem>>, vector<1x8x1x8xf32>
    %17 = vector.shape_cast %16 : vector<1x8x1x8xf32> to vector<8x8xf32>
    %cst = arith.constant dense<0.000000e+00> : vector<4x8xf32>
    %18 = tpu.matmul %9, %17, %cst {dimension_numbers = #tpu.dot_dimension_numbers<[1], [0], [0], [1], [0, 0, 1, 1], [], []>} : vector<4x8xf32>, vector<8x8xf32>, vector<4x8xf32> -> vector<4x8xf32>
    %cst_32 = arith.constant dense<0.000000e+00> : vector<4x8xf32>
    %19 = tpu.matmul %11, %17, %cst_32 {dimension_numbers = #tpu.dot_dimension_numbers<[1], [0], [0], [1], [0, 0, 1, 1], [], []>} : vector<4x8xf32>, vector<8x8xf32>, vector<4x8xf32> -> vector<4x8xf32>
    %cst_33 = arith.constant dense<0.000000e+00> : vector<4x8xf32>
    %20 = tpu.matmul %13, %17, %cst_33 {dimension_numbers = #tpu.dot_dimension_numbers<[1], [0], [0], [1], [0, 0, 1, 1], [], []>} : vector<4x8xf32>, vector<8x8xf32>, vector<4x8xf32> -> vector<4x8xf32>
    %cst_34 = arith.constant dense<0.000000e+00> : vector<4x8xf32>
    %21 = tpu.matmul %15, %17, %cst_34 {dimension_numbers = #tpu.dot_dimension_numbers<[1], [0], [0], [1], [0, 0, 1, 1], [], []>} : vector<4x8xf32>, vector<8x8xf32>, vector<4x8xf32> -> vector<4x8xf32>
    %cst_35 = arith.constant dense<0.000000e+00> : vector<4x16xf32>
    %22 = tpu.matmul %18, %5, %cst_35 {dimension_numbers = #tpu.dot_dimension_numbers<[1], [0], [0], [1], [0, 0, 1, 1], [], []>} : vector<4x8xf32>, vector<8x16xf32>, vector<4x16xf32> -> vector<4x16xf32>
    %cst_36 = arith.constant dense<0.000000e+00> : vector<4x16xf32>
    %23 = tpu.matmul %19, %6, %cst_36 {dimension_numbers = #tpu.dot_dimension_numbers<[1], [0], [0], [1], [0, 0, 1, 1], [], []>} : vector<4x8xf32>, vector<8x16xf32>, vector<4x16xf32> -> vector<4x16xf32>
    %24 = arith.addf %22, %23 : vector<4x16xf32>
    %25 = vector.broadcast %7 : vector<4x1xf32> to vector<4x16xf32>
    %26 = arith.addf %24, %25 : vector<4x16xf32>
    %cst_37 = arith.constant dense<0.000000e+00> : vector<4x16xf32>
    %27 = tpu.matmul %20, %5, %cst_37 {dimension_numbers = #tpu.dot_dimension_numbers<[1], [0], [0], [1], [0, 0, 1, 1], [], []>} : vector<4x8xf32>, vector<8x16xf32>, vector<4x16xf32> -> vector<4x16xf32>
    %cst_38 = arith.constant dense<0.000000e+00> : vector<4x16xf32>
    %28 = tpu.matmul %21, %6, %cst_38 {dimension_numbers = #tpu.dot_dimension_numbers<[1], [0], [0], [1], [0, 0, 1, 1], [], []>} : vector<4x8xf32>, vector<8x16xf32>, vector<4x16xf32> -> vector<4x16xf32>
    %29 = arith.addf %27, %28 : vector<4x16xf32>
    %30 = vector.broadcast %7 : vector<4x1xf32> to vector<4x16xf32>
    %31 = arith.addf %29, %30 : vector<4x16xf32>
    %c0_39 = arith.constant 0 : index
    %c4 = arith.constant 4 : index
    %c0_40 = arith.constant 0 : index
    %c0_41 = arith.constant 0 : index
    %32 = vector.load %arg9[%c0_39, %c4, %c0_40, %c0_41] : memref<1x8x16x16xf32, #tpu.memory_space<vmem>>, vector<1x4x1x16xf32>
    %33 = vector.shape_cast %32 : vector<1x4x1x16xf32> to vector<4x16xf32>
    %34 = vector.shape_cast %26 : vector<4x16xf32> to vector<1x4x1x16xf32>
    tpu.vector_store %arg9[%c0_39, %c4, %c0_40, %c0_41], %34 {strides = array<i32>} : memref<1x8x16x16xf32, #tpu.memory_space<vmem>>, vector<1x4x1x16xf32>,
    %c0_42 = arith.constant 0 : index
    %c4_43 = arith.constant 4 : index
    %c1_44 = arith.constant 1 : index
    %c0_45 = arith.constant 0 : index
    %35 = vector.load %arg9[%c0_42, %c4_43, %c1_44, %c0_45] : memref<1x8x16x16xf32, #tpu.memory_space<vmem>>, vector<1x4x1x16xf32>
    %36 = vector.shape_cast %35 : vector<1x4x1x16xf32> to vector<4x16xf32>
    %37 = vector.shape_cast %31 : vector<4x16xf32> to vector<1x4x1x16xf32>
    tpu.vector_store %arg9[%c0_42, %c4_43, %c1_44, %c0_45], %37 {strides = array<i32>} : memref<1x8x16x16xf32, #tpu.memory_space<vmem>>, vector<1x4x1x16xf32>,
    %c0_46 = arith.constant 0 : index
    %c0_47 = arith.constant 0 : index
    %c1_48 = arith.constant 1 : index
    %c0_49 = arith.constant 0 : index
    %38 = vector.load %arg3[%c0_46, %c0_47, %c1_48, %c0_49] : memref<1x8x8x8xf32, #tpu.memory_space<vmem>>, vector<1x8x1x8xf32>
    %39 = vector.shape_cast %38 : vector<1x8x1x8xf32> to vector<8x8xf32>
    %cst_50 = arith.constant dense<0.000000e+00> : vector<4x8xf32>
    %40 = tpu.matmul %9, %39, %cst_50 {dimension_numbers = #tpu.dot_dimension_numbers<[1], [0], [0], [1], [0, 0, 1, 1], [], []>} : vector<4x8xf32>, vector<8x8xf32>, vector<4x8xf32> -> vector<4x8xf32>
    %cst_51 = arith.constant dense<0.000000e+00> : vector<4x8xf32>
    %41 = tpu.matmul %11, %39, %cst_51 {dimension_numbers = #tpu.dot_dimension_numbers<[1], [0], [0], [1], [0, 0, 1, 1], [], []>} : vector<4x8xf32>, vector<8x8xf32>, vector<4x8xf32> -> vector<4x8xf32>
    %cst_52 = arith.constant dense<0.000000e+00> : vector<4x8xf32>
    %42 = tpu.matmul %13, %39, %cst_52 {dimension_numbers = #tpu.dot_dimension_numbers<[1], [0], [0], [1], [0, 0, 1, 1], [], []>} : vector<4x8xf32>, vector<8x8xf32>, vector<4x8xf32> -> vector<4x8xf32>
    %cst_53 = arith.constant dense<0.000000e+00> : vector<4x8xf32>
    %43 = tpu.matmul %15, %39, %cst_53 {dimension_numbers = #tpu.dot_dimension_numbers<[1], [0], [0], [1], [0, 0, 1, 1], [], []>} : vector<4x8xf32>, vector<8x8xf32>, vector<4x8xf32> -> vector<4x8xf32>
    %cst_54 = arith.constant dense<0.000000e+00> : vector<4x16xf32>
    %44 = tpu.matmul %40, %5, %cst_54 {dimension_numbers = #tpu.dot_dimension_numbers<[1], [0], [0], [1], [0, 0, 1, 1], [], []>} : vector<4x8xf32>, vector<8x16xf32>, vector<4x16xf32> -> vector<4x16xf32>
    %cst_55 = arith.constant dense<0.000000e+00> : vector<4x16xf32>
    %45 = tpu.matmul %41, %6, %cst_55 {dimension_numbers = #tpu.dot_dimension_numbers<[1], [0], [0], [1], [0, 0, 1, 1], [], []>} : vector<4x8xf32>, vector<8x16xf32>, vector<4x16xf32> -> vector<4x16xf32>
    %46 = arith.addf %44, %45 : vector<4x16xf32>
    %47 = vector.broadcast %7 : vector<4x1xf32> to vector<4x16xf32>
    %48 = arith.addf %46, %47 : vector<4x16xf32>
    %cst_56 = arith.constant dense<0.000000e+00> : vector<4x16xf32>
    %49 = tpu.matmul %42, %5, %cst_56 {dimension_numbers = #tpu.dot_dimension_numbers<[1], [0], [0], [1], [0, 0, 1, 1], [], []>} : vector<4x8xf32>, vector<8x16xf32>, vector<4x16xf32> -> vector<4x16xf32>
    %cst_57 = arith.constant dense<0.000000e+00> : vector<4x16xf32>
    %50 = tpu.matmul %43, %6, %cst_57 {dimension_numbers = #tpu.dot_dimension_numbers<[1], [0], [0], [1], [0, 0, 1, 1], [], []>} : vector<4x8xf32>, vector<8x16xf32>, vector<4x16xf32> -> vector<4x16xf32>
    %51 = arith.addf %49, %50 : vector<4x16xf32>
    %52 = vector.broadcast %7 : vector<4x1xf32> to vector<4x16xf32>
    %53 = arith.addf %51, %52 : vector<4x16xf32>
    %c0_58 = arith.constant 0 : index
    %c4_59 = arith.constant 4 : index
    %c2 = arith.constant 2 : index
    %c0_60 = arith.constant 0 : index
    %54 = vector.load %arg9[%c0_58, %c4_59, %c2, %c0_60] : memref<1x8x16x16xf32, #tpu.memory_space<vmem>>, vector<1x4x1x16xf32>
    %55 = vector.shape_cast %54 : vector<1x4x1x16xf32> to vector<4x16xf32>
    %56 = vector.shape_cast %48 : vector<4x16xf32> to vector<1x4x1x16xf32>
    tpu.vector_store %arg9[%c0_58, %c4_59, %c2, %c0_60], %56 {strides = array<i32>} : memref<1x8x16x16xf32, #tpu.memory_space<vmem>>, vector<1x4x1x16xf32>,
    %c0_61 = arith.constant 0 : index
    %c4_62 = arith.constant 4 : index
    %c3 = arith.constant 3 : index
    %c0_63 = arith.constant 0 : index
    %57 = vector.load %arg9[%c0_61, %c4_62, %c3, %c0_63] : memref<1x8x16x16xf32, #tpu.memory_space<vmem>>, vector<1x4x1x16xf32>
    %58 = vector.shape_cast %57 : vector<1x4x1x16xf32> to vector<4x16xf32>
    %59 = vector.shape_cast %53 : vector<4x16xf32> to vector<1x4x1x16xf32>
    tpu.vector_store %arg9[%c0_61, %c4_62, %c3, %c0_63], %59 {strides = array<i32>} : memref<1x8x16x16xf32, #tpu.memory_space<vmem>>, vector<1x4x1x16xf32>,
    %c0_64 = arith.constant 0 : index
    %c0_65 = arith.constant 0 : index
    %c2_66 = arith.constant 2 : index
    %c0_67 = arith.constant 0 : index
    %60 = vector.load %arg3[%c0_64, %c0_65, %c2_66, %c0_67] : memref<1x8x8x8xf32, #tpu.memory_space<vmem>>, vector<1x8x1x8xf32>
    %61 = vector.shape_cast %60 : vector<1x8x1x8xf32> to vector<8x8xf32>
    %cst_68 = arith.constant dense<0.000000e+00> : vector<4x8xf32>
    %62 = tpu.matmul %9, %61, %cst_68 {dimension_numbers = #tpu.dot_dimension_numbers<[1], [0], [0], [1], [0, 0, 1, 1], [], []>} : vector<4x8xf32>, vector<8x8xf32>, vector<4x8xf32> -> vector<4x8xf32>
    %cst_69 = arith.constant dense<0.000000e+00> : vector<4x8xf32>
    %63 = tpu.matmul %11, %61, %cst_69 {dimension_numbers = #tpu.dot_dimension_numbers<[1], [0], [0], [1], [0, 0, 1, 1], [], []>} : vector<4x8xf32>, vector<8x8xf32>, vector<4x8xf32> -> vector<4x8xf32>
    %cst_70 = arith.constant dense<0.000000e+00> : vector<4x8xf32>
    %64 = tpu.matmul %13, %61, %cst_70 {dimension_numbers = #tpu.dot_dimension_numbers<[1], [0], [0], [1], [0, 0, 1, 1], [], []>} : vector<4x8xf32>, vector<8x8xf32>, vector<4x8xf32> -> vector<4x8xf32>
    %cst_71 = arith.constant dense<0.000000e+00> : vector<4x8xf32>
    %65 = tpu.matmul %15, %61, %cst_71 {dimension_numbers = #tpu.dot_dimension_numbers<[1], [0], [0], [1], [0, 0, 1, 1], [], []>} : vector<4x8xf32>, vector<8x8xf32>, vector<4x8xf32> -> vector<4x8xf32>
    %cst_72 = arith.constant dense<0.000000e+00> : vector<4x16xf32>
    %66 = tpu.matmul %62, %5, %cst_72 {dimension_numbers = #tpu.dot_dimension_numbers<[1], [0], [0], [1], [0, 0, 1, 1], [], []>} : vector<4x8xf32>, vector<8x16xf32>, vector<4x16xf32> -> vector<4x16xf32>
    %cst_73 = arith.constant dense<0.000000e+00> : vector<4x16xf32>
    %67 = tpu.matmul %63, %6, %cst_73 {dimension_numbers = #tpu.dot_dimension_numbers<[1], [0], [0], [1], [0, 0, 1, 1], [], []>} : vector<4x8xf32>, vector<8x16xf32>, vector<4x16xf32> -> vector<4x16xf32>
    %68 = arith.addf %66, %67 : vector<4x16xf32>
    %69 = vector.broadcast %7 : vector<4x1xf32> to vector<4x16xf32>
    %70 = arith.addf %68, %69 : vector<4x16xf32>
    %cst_74 = arith.constant dense<0.000000e+00> : vector<4x16xf32>
    %71 = tpu.matmul %64, %5, %cst_74 {dimension_numbers = #tpu.dot_dimension_numbers<[1], [0], [0], [1], [0, 0, 1, 1], [], []>} : vector<4x8xf32>, vector<8x16xf32>, vector<4x16xf32> -> vector<4x16xf32>
    %cst_75 = arith.constant dense<0.000000e+00> : vector<4x16xf32>
    %72 = tpu.matmul %65, %6, %cst_75 {dimension_numbers = #tpu.dot_dimension_numbers<[1], [0], [0], [1], [0, 0, 1, 1], [], []>} : vector<4x8xf32>, vector<8x16xf32>, vector<4x16xf32> -> vector<4x16xf32>
    %73 = arith.addf %71, %72 : vector<4x16xf32>
    %74 = vector.broadcast %7 : vector<4x1xf32> to vector<4x16xf32>
    %75 = arith.addf %73, %74 : vector<4x16xf32>
    %c0_76 = arith.constant 0 : index
    %c4_77 = arith.constant 4 : index
    %c4_78 = arith.constant 4 : index
    %c0_79 = arith.constant 0 : index
    %76 = vector.load %arg9[%c0_76, %c4_77, %c4_78, %c0_79] : memref<1x8x16x16xf32, #tpu.memory_space<vmem>>, vector<1x4x1x16xf32>
    %77 = vector.shape_cast %76 : vector<1x4x1x16xf32> to vector<4x16xf32>
    %78 = vector.shape_cast %70 : vector<4x16xf32> to vector<1x4x1x16xf32>
    tpu.vector_store %arg9[%c0_76, %c4_77, %c4_78, %c0_79], %78 {strides = array<i32>} : memref<1x8x16x16xf32, #tpu.memory_space<vmem>>, vector<1x4x1x16xf32>,
    %c0_80 = arith.constant 0 : index
    %c4_81 = arith.constant 4 : index
    %c5 = arith.constant 5 : index
    %c0_82 = arith.constant 0 : index
    %79 = vector.load %arg9[%c0_80, %c4_81, %c5, %c0_82] : memref<1x8x16x16xf32, #tpu.memory_space<vmem>>, vector<1x4x1x16xf32>
    %80 = vector.shape_cast %79 : vector<1x4x1x16xf32> to vector<4x16xf32>
    %81 = vector.shape_cast %75 : vector<4x16xf32> to vector<1x4x1x16xf32>
    tpu.vector_store %arg9[%c0_80, %c4_81, %c5, %c0_82], %81 {strides = array<i32>} : memref<1x8x16x16xf32, #tpu.memory_space<vmem>>, vector<1x4x1x16xf32>,
    %c0_83 = arith.constant 0 : index
    %c0_84 = arith.constant 0 : index
    %c3_85 = arith.constant 3 : index
    %c0_86 = arith.constant 0 : index
    %82 = vector.load %arg3[%c0_83, %c0_84, %c3_85, %c0_86] : memref<1x8x8x8xf32, #tpu.memory_space<vmem>>, vector<1x8x1x8xf32>
    %83 = vector.shape_cast %82 : vector<1x8x1x8xf32> to vector<8x8xf32>
    %cst_87 = arith.constant dense<0.000000e+00> : vector<4x8xf32>
    %84 = tpu.matmul %9, %83, %cst_87 {dimension_numbers = #tpu.dot_dimension_numbers<[1], [0], [0], [1], [0, 0, 1, 1], [], []>} : vector<4x8xf32>, vector<8x8xf32>, vector<4x8xf32> -> vector<4x8xf32>
    %cst_88 = arith.constant dense<0.000000e+00> : vector<4x8xf32>
    %85 = tpu.matmul %11, %83, %cst_88 {dimension_numbers = #tpu.dot_dimension_numbers<[1], [0], [0], [1], [0, 0, 1, 1], [], []>} : vector<4x8xf32>, vector<8x8xf32>, vector<4x8xf32> -> vector<4x8xf32>
    %cst_89 = arith.constant dense<0.000000e+00> : vector<4x8xf32>
    %86 = tpu.matmul %13, %83, %cst_89 {dimension_numbers = #tpu.dot_dimension_numbers<[1], [0], [0], [1], [0, 0, 1, 1], [], []>} : vector<4x8xf32>, vector<8x8xf32>, vector<4x8xf32> -> vector<4x8xf32>
    %cst_90 = arith.constant dense<0.000000e+00> : vector<4x8xf32>
    %87 = tpu.matmul %15, %83, %cst_90 {dimension_numbers = #tpu.dot_dimension_numbers<[1], [0], [0], [1], [0, 0, 1, 1], [], []>} : vector<4x8xf32>, vector<8x8xf32>, vector<4x8xf32> -> vector<4x8xf32>
    %cst_91 = arith.constant dense<0.000000e+00> : vector<4x16xf32>
    %88 = tpu.matmul %84, %5, %cst_91 {dimension_numbers = #tpu.dot_dimension_numbers<[1], [0], [0], [1], [0, 0, 1, 1], [], []>} : vector<4x8xf32>, vector<8x16xf32>, vector<4x16xf32> -> vector<4x16xf32>
    %cst_92 = arith.constant dense<0.000000e+00> : vector<4x16xf32>
    %89 = tpu.matmul %85, %6, %cst_92 {dimension_numbers = #tpu.dot_dimension_numbers<[1], [0], [0], [1], [0, 0, 1, 1], [], []>} : vector<4x8xf32>, vector<8x16xf32>, vector<4x16xf32> -> vector<4x16xf32>
    %90 = arith.addf %88, %89 : vector<4x16xf32>
    %91 = vector.broadcast %7 : vector<4x1xf32> to vector<4x16xf32>
    %92 = arith.addf %90, %91 : vector<4x16xf32>
    %cst_93 = arith.constant dense<0.000000e+00> : vector<4x16xf32>
    %93 = tpu.matmul %86, %5, %cst_93 {dimension_numbers = #tpu.dot_dimension_numbers<[1], [0], [0], [1], [0, 0, 1, 1], [], []>} : vector<4x8xf32>, vector<8x16xf32>, vector<4x16xf32> -> vector<4x16xf32>
    %cst_94 = arith.constant dense<0.000000e+00> : vector<4x16xf32>
    %94 = tpu.matmul %87, %6, %cst_94 {dimension_numbers = #tpu.dot_dimension_numbers<[1], [0], [0], [1], [0, 0, 1, 1], [], []>} : vector<4x8xf32>, vector<8x16xf32>, vector<4x16xf32> -> vector<4x16xf32>
    %95 = arith.addf %93, %94 : vector<4x16xf32>
    %96 = vector.broadcast %7 : vector<4x1xf32> to vector<4x16xf32>
    %97 = arith.addf %95, %96 : vector<4x16xf32>
    %c0_95 = arith.constant 0 : index
    %c4_96 = arith.constant 4 : index
    %c6 = arith.constant 6 : index
    %c0_97 = arith.constant 0 : index
    %98 = vector.load %arg9[%c0_95, %c4_96, %c6, %c0_97] : memref<1x8x16x16xf32, #tpu.memory_space<vmem>>, vector<1x4x1x16xf32>
    %99 = vector.shape_cast %98 : vector<1x4x1x16xf32> to vector<4x16xf32>
    %100 = vector.shape_cast %92 : vector<4x16xf32> to vector<1x4x1x16xf32>
    tpu.vector_store %arg9[%c0_95, %c4_96, %c6, %c0_97], %100 {strides = array<i32>} : memref<1x8x16x16xf32, #tpu.memory_space<vmem>>, vector<1x4x1x16xf32>,
    %c0_98 = arith.constant 0 : index
    %c4_99 = arith.constant 4 : index
    %c7 = arith.constant 7 : index
    %c0_100 = arith.constant 0 : index
    %101 = vector.load %arg9[%c0_98, %c4_99, %c7, %c0_100] : memref<1x8x16x16xf32, #tpu.memory_space<vmem>>, vector<1x4x1x16xf32>
    %102 = vector.shape_cast %101 : vector<1x4x1x16xf32> to vector<4x16xf32>
    %103 = vector.shape_cast %97 : vector<4x16xf32> to vector<1x4x1x16xf32>
    tpu.vector_store %arg9[%c0_98, %c4_99, %c7, %c0_100], %103 {strides = array<i32>} : memref<1x8x16x16xf32, #tpu.memory_space<vmem>>, vector<1x4x1x16xf32>,
    %c0_101 = arith.constant 0 : index
    %c0_102 = arith.constant 0 : index
    %c4_103 = arith.constant 4 : index
    %c0_104 = arith.constant 0 : index
    %104 = vector.load %arg3[%c0_101, %c0_102, %c4_103, %c0_104] : memref<1x8x8x8xf32, #tpu.memory_space<vmem>>, vector<1x8x1x8xf32>
    %105 = vector.shape_cast %104 : vector<1x8x1x8xf32> to vector<8x8xf32>
    %cst_105 = arith.constant dense<0.000000e+00> : vector<4x8xf32>
    %106 = tpu.matmul %9, %105, %cst_105 {dimension_numbers = #tpu.dot_dimension_numbers<[1], [0], [0], [1], [0, 0, 1, 1], [], []>} : vector<4x8xf32>, vector<8x8xf32>, vector<4x8xf32> -> vector<4x8xf32>
    %cst_106 = arith.constant dense<0.000000e+00> : vector<4x8xf32>
    %107 = tpu.matmul %11, %105, %cst_106 {dimension_numbers = #tpu.dot_dimension_numbers<[1], [0], [0], [1], [0, 0, 1, 1], [], []>} : vector<4x8xf32>, vector<8x8xf32>, vector<4x8xf32> -> vector<4x8xf32>
    %cst_107 = arith.constant dense<0.000000e+00> : vector<4x8xf32>
    %108 = tpu.matmul %13, %105, %cst_107 {dimension_numbers = #tpu.dot_dimension_numbers<[1], [0], [0], [1], [0, 0, 1, 1], [], []>} : vector<4x8xf32>, vector<8x8xf32>, vector<4x8xf32> -> vector<4x8xf32>
    %cst_108 = arith.constant dense<0.000000e+00> : vector<4x8xf32>
    %109 = tpu.matmul %15, %105, %cst_108 {dimension_numbers = #tpu.dot_dimension_numbers<[1], [0], [0], [1], [0, 0, 1, 1], [], []>} : vector<4x8xf32>, vector<8x8xf32>, vector<4x8xf32> -> vector<4x8xf32>
    %cst_109 = arith.constant dense<0.000000e+00> : vector<4x16xf32>
    %110 = tpu.matmul %106, %5, %cst_109 {dimension_numbers = #tpu.dot_dimension_numbers<[1], [0], [0], [1], [0, 0, 1, 1], [], []>} : vector<4x8xf32>, vector<8x16xf32>, vector<4x16xf32> -> vector<4x16xf32>
    %cst_110 = arith.constant dense<0.000000e+00> : vector<4x16xf32>
    %111 = tpu.matmul %107, %6, %cst_110 {dimension_numbers = #tpu.dot_dimension_numbers<[1], [0], [0], [1], [0, 0, 1, 1], [], []>} : vector<4x8xf32>, vector<8x16xf32>, vector<4x16xf32> -> vector<4x16xf32>
    %112 = arith.addf %110, %111 : vector<4x16xf32>
    %113 = vector.broadcast %7 : vector<4x1xf32> to vector<4x16xf32>
    %114 = arith.addf %112, %113 : vector<4x16xf32>
    %cst_111 = arith.constant dense<0.000000e+00> : vector<4x16xf32>
    %115 = tpu.matmul %108, %5, %cst_111 {dimension_numbers = #tpu.dot_dimension_numbers<[1], [0], [0], [1], [0, 0, 1, 1], [], []>} : vector<4x8xf32>, vector<8x16xf32>, vector<4x16xf32> -> vector<4x16xf32>
    %cst_112 = arith.constant dense<0.000000e+00> : vector<4x16xf32>
    %116 = tpu.matmul %109, %6, %cst_112 {dimension_numbers = #tpu.dot_dimension_numbers<[1], [0], [0], [1], [0, 0, 1, 1], [], []>} : vector<4x8xf32>, vector<8x16xf32>, vector<4x16xf32> -> vector<4x16xf32>
    %117 = arith.addf %115, %116 : vector<4x16xf32>
    %118 = vector.broadcast %7 : vector<4x1xf32> to vector<4x16xf32>
    %119 = arith.addf %117, %118 : vector<4x16xf32>
    %c0_113 = arith.constant 0 : index
    %c4_114 = arith.constant 4 : index
    %c8 = arith.constant 8 : index
    %c0_115 = arith.constant 0 : index
    %120 = vector.load %arg9[%c0_113, %c4_114, %c8, %c0_115] : memref<1x8x16x16xf32, #tpu.memory_space<vmem>>, vector<1x4x1x16xf32>
    %121 = vector.shape_cast %120 : vector<1x4x1x16xf32> to vector<4x16xf32>
    %122 = vector.shape_cast %114 : vector<4x16xf32> to vector<1x4x1x16xf32>
    tpu.vector_store %arg9[%c0_113, %c4_114, %c8, %c0_115], %122 {strides = array<i32>} : memref<1x8x16x16xf32, #tpu.memory_space<vmem>>, vector<1x4x1x16xf32>,
    %c0_116 = arith.constant 0 : index
    %c4_117 = arith.constant 4 : index
    %c9 = arith.constant 9 : index
    %c0_118 = arith.constant 0 : index
    %123 = vector.load %arg9[%c0_116, %c4_117, %c9, %c0_118] : memref<1x8x16x16xf32, #tpu.memory_space<vmem>>, vector<1x4x1x16xf32>
    %124 = vector.shape_cast %123 : vector<1x4x1x16xf32> to vector<4x16xf32>
    %125 = vector.shape_cast %119 : vector<4x16xf32> to vector<1x4x1x16xf32>
    tpu.vector_store %arg9[%c0_116, %c4_117, %c9, %c0_118], %125 {strides = array<i32>} : memref<1x8x16x16xf32, #tpu.memory_space<vmem>>, vector<1x4x1x16xf32>,
    %c0_119 = arith.constant 0 : index
    %c0_120 = arith.constant 0 : index
    %c5_121 = arith.constant 5 : index
    %c0_122 = arith.constant 0 : index
    %126 = vector.load %arg3[%c0_119, %c0_120, %c5_121, %c0_122] : memref<1x8x8x8xf32, #tpu.memory_space<vmem>>, vector<1x8x1x8xf32>
    %127 = vector.shape_cast %126 : vector<1x8x1x8xf32> to vector<8x8xf32>
    %cst_123 = arith.constant dense<0.000000e+00> : vector<4x8xf32>
    %128 = tpu.matmul %9, %127, %cst_123 {dimension_numbers = #tpu.dot_dimension_numbers<[1], [0], [0], [1], [0, 0, 1, 1], [], []>} : vector<4x8xf32>, vector<8x8xf32>, vector<4x8xf32> -> vector<4x8xf32>
    %cst_124 = arith.constant dense<0.000000e+00> : vector<4x8xf32>
    %129 = tpu.matmul %11, %127, %cst_124 {dimension_numbers = #tpu.dot_dimension_numbers<[1], [0], [0], [1], [0, 0, 1, 1], [], []>} : vector<4x8xf32>, vector<8x8xf32>, vector<4x8xf32> -> vector<4x8xf32>
    %cst_125 = arith.constant dense<0.000000e+00> : vector<4x8xf32>
    %130 = tpu.matmul %13, %127, %cst_125 {dimension_numbers = #tpu.dot_dimension_numbers<[1], [0], [0], [1], [0, 0, 1, 1], [], []>} : vector<4x8xf32>, vector<8x8xf32>, vector<4x8xf32> -> vector<4x8xf32>
    %cst_126 = arith.constant dense<0.000000e+00> : vector<4x8xf32>
    %131 = tpu.matmul %15, %127, %cst_126 {dimension_numbers = #tpu.dot_dimension_numbers<[1], [0], [0], [1], [0, 0, 1, 1], [], []>} : vector<4x8xf32>, vector<8x8xf32>, vector<4x8xf32> -> vector<4x8xf32>
    %cst_127 = arith.constant dense<0.000000e+00> : vector<4x16xf32>
    %132 = tpu.matmul %128, %5, %cst_127 {dimension_numbers = #tpu.dot_dimension_numbers<[1], [0], [0], [1], [0, 0, 1, 1], [], []>} : vector<4x8xf32>, vector<8x16xf32>, vector<4x16xf32> -> vector<4x16xf32>
    %cst_128 = arith.constant dense<0.000000e+00> : vector<4x16xf32>
    %133 = tpu.matmul %129, %6, %cst_128 {dimension_numbers = #tpu.dot_dimension_numbers<[1], [0], [0], [1], [0, 0, 1, 1], [], []>} : vector<4x8xf32>, vector<8x16xf32>, vector<4x16xf32> -> vector<4x16xf32>
    %134 = arith.addf %132, %133 : vector<4x16xf32>
    %135 = vector.broadcast %7 : vector<4x1xf32> to vector<4x16xf32>
    %136 = arith.addf %134, %135 : vector<4x16xf32>
    %cst_129 = arith.constant dense<0.000000e+00> : vector<4x16xf32>
    %137 = tpu.matmul %130, %5, %cst_129 {dimension_numbers = #tpu.dot_dimension_numbers<[1], [0], [0], [1], [0, 0, 1, 1], [], []>} : vector<4x8xf32>, vector<8x16xf32>, vector<4x16xf32> -> vector<4x16xf32>
    %cst_130 = arith.constant dense<0.000000e+00> : vector<4x16xf32>
    %138 = tpu.matmul %131, %6, %cst_130 {dimension_numbers = #tpu.dot_dimension_numbers<[1], [0], [0], [1], [0, 0, 1, 1], [], []>} : vector<4x8xf32>, vector<8x16xf32>, vector<4x16xf32> -> vector<4x16xf32>
    %139 = arith.addf %137, %138 : vector<4x16xf32>
    %140 = vector.broadcast %7 : vector<4x1xf32> to vector<4x16xf32>
    %141 = arith.addf %139, %140 : vector<4x16xf32>
    %c0_131 = arith.constant 0 : index
    %c4_132 = arith.constant 4 : index
    %c10 = arith.constant 10 : index
    %c0_133 = arith.constant 0 : index
    %142 = vector.load %arg9[%c0_131, %c4_132, %c10, %c0_133] : memref<1x8x16x16xf32, #tpu.memory_space<vmem>>, vector<1x4x1x16xf32>
    %143 = vector.shape_cast %142 : vector<1x4x1x16xf32> to vector<4x16xf32>
    %144 = vector.shape_cast %136 : vector<4x16xf32> to vector<1x4x1x16xf32>
    tpu.vector_store %arg9[%c0_131, %c4_132, %c10, %c0_133], %144 {strides = array<i32>} : memref<1x8x16x16xf32, #tpu.memory_space<vmem>>, vector<1x4x1x16xf32>,
    %c0_134 = arith.constant 0 : index
    %c4_135 = arith.constant 4 : index
    %c11 = arith.constant 11 : index
    %c0_136 = arith.constant 0 : index
    %145 = vector.load %arg9[%c0_134, %c4_135, %c11, %c0_136] : memref<1x8x16x16xf32, #tpu.memory_space<vmem>>, vector<1x4x1x16xf32>
    %146 = vector.shape_cast %145 : vector<1x4x1x16xf32> to vector<4x16xf32>
    %147 = vector.shape_cast %141 : vector<4x16xf32> to vector<1x4x1x16xf32>
    tpu.vector_store %arg9[%c0_134, %c4_135, %c11, %c0_136], %147 {strides = array<i32>} : memref<1x8x16x16xf32, #tpu.memory_space<vmem>>, vector<1x4x1x16xf32>,
    %c0_137 = arith.constant 0 : index
    %c0_138 = arith.constant 0 : index
    %c6_139 = arith.constant 6 : index
    %c0_140 = arith.constant 0 : index
    %148 = vector.load %arg3[%c0_137, %c0_138, %c6_139, %c0_140] : memref<1x8x8x8xf32, #tpu.memory_space<vmem>>, vector<1x8x1x8xf32>
    %149 = vector.shape_cast %148 : vector<1x8x1x8xf32> to vector<8x8xf32>
    %cst_141 = arith.constant dense<0.000000e+00> : vector<4x8xf32>
    %150 = tpu.matmul %9, %149, %cst_141 {dimension_numbers = #tpu.dot_dimension_numbers<[1], [0], [0], [1], [0, 0, 1, 1], [], []>} : vector<4x8xf32>, vector<8x8xf32>, vector<4x8xf32> -> vector<4x8xf32>
    %cst_142 = arith.constant dense<0.000000e+00> : vector<4x8xf32>
    %151 = tpu.matmul %11, %149, %cst_142 {dimension_numbers = #tpu.dot_dimension_numbers<[1], [0], [0], [1], [0, 0, 1, 1], [], []>} : vector<4x8xf32>, vector<8x8xf32>, vector<4x8xf32> -> vector<4x8xf32>
    %cst_143 = arith.constant dense<0.000000e+00> : vector<4x8xf32>
    %152 = tpu.matmul %13, %149, %cst_143 {dimension_numbers = #tpu.dot_dimension_numbers<[1], [0], [0], [1], [0, 0, 1, 1], [], []>} : vector<4x8xf32>, vector<8x8xf32>, vector<4x8xf32> -> vector<4x8xf32>
    %cst_144 = arith.constant dense<0.000000e+00> : vector<4x8xf32>
    %153 = tpu.matmul %15, %149, %cst_144 {dimension_numbers = #tpu.dot_dimension_numbers<[1], [0], [0], [1], [0, 0, 1, 1], [], []>} : vector<4x8xf32>, vector<8x8xf32>, vector<4x8xf32> -> vector<4x8xf32>
    %cst_145 = arith.constant dense<0.000000e+00> : vector<4x16xf32>
    %154 = tpu.matmul %150, %5, %cst_145 {dimension_numbers = #tpu.dot_dimension_numbers<[1], [0], [0], [1], [0, 0, 1, 1], [], []>} : vector<4x8xf32>, vector<8x16xf32>, vector<4x16xf32> -> vector<4x16xf32>
    %cst_146 = arith.constant dense<0.000000e+00> : vector<4x16xf32>
    %155 = tpu.matmul %151, %6, %cst_146 {dimension_numbers = #tpu.dot_dimension_numbers<[1], [0], [0], [1], [0, 0, 1, 1], [], []>} : vector<4x8xf32>, vector<8x16xf32>, vector<4x16xf32> -> vector<4x16xf32>
    %156 = arith.addf %154, %155 : vector<4x16xf32>
    %157 = vector.broadcast %7 : vector<4x1xf32> to vector<4x16xf32>
    %158 = arith.addf %156, %157 : vector<4x16xf32>
    %cst_147 = arith.constant dense<0.000000e+00> : vector<4x16xf32>
    %159 = tpu.matmul %152, %5, %cst_147 {dimension_numbers = #tpu.dot_dimension_numbers<[1], [0], [0], [1], [0, 0, 1, 1], [], []>} : vector<4x8xf32>, vector<8x16xf32>, vector<4x16xf32> -> vector<4x16xf32>
    %cst_148 = arith.constant dense<0.000000e+00> : vector<4x16xf32>
    %160 = tpu.matmul %153, %6, %cst_148 {dimension_numbers = #tpu.dot_dimension_numbers<[1], [0], [0], [1], [0, 0, 1, 1], [], []>} : vector<4x8xf32>, vector<8x16xf32>, vector<4x16xf32> -> vector<4x16xf32>
    %161 = arith.addf %159, %160 : vector<4x16xf32>
    %162 = vector.broadcast %7 : vector<4x1xf32> to vector<4x16xf32>
    %163 = arith.addf %161, %162 : vector<4x16xf32>
    %c0_149 = arith.constant 0 : index
    %c4_150 = arith.constant 4 : index
    %c12 = arith.constant 12 : index
    %c0_151 = arith.constant 0 : index
    %164 = vector.load %arg9[%c0_149, %c4_150, %c12, %c0_151] : memref<1x8x16x16xf32, #tpu.memory_space<vmem>>, vector<1x4x1x16xf32>
    %165 = vector.shape_cast %164 : vector<1x4x1x16xf32> to vector<4x16xf32>
    %166 = vector.shape_cast %158 : vector<4x16xf32> to vector<1x4x1x16xf32>
    tpu.vector_store %arg9[%c0_149, %c4_150, %c12, %c0_151], %166 {strides = array<i32>} : memref<1x8x16x16xf32, #tpu.memory_space<vmem>>, vector<1x4x1x16xf32>,
    %c0_152 = arith.constant 0 : index
    %c4_153 = arith.constant 4 : index
    %c13 = arith.constant 13 : index
    %c0_154 = arith.constant 0 : index
    %167 = vector.load %arg9[%c0_152, %c4_153, %c13, %c0_154] : memref<1x8x16x16xf32, #tpu.memory_space<vmem>>, vector<1x4x1x16xf32>
    %168 = vector.shape_cast %167 : vector<1x4x1x16xf32> to vector<4x16xf32>
    %169 = vector.shape_cast %163 : vector<4x16xf32> to vector<1x4x1x16xf32>
    tpu.vector_store %arg9[%c0_152, %c4_153, %c13, %c0_154], %169 {strides = array<i32>} : memref<1x8x16x16xf32, #tpu.memory_space<vmem>>, vector<1x4x1x16xf32>,
    %c0_155 = arith.constant 0 : index
    %c0_156 = arith.constant 0 : index
    %c7_157 = arith.constant 7 : index
    %c0_158 = arith.constant 0 : index
    %170 = vector.load %arg3[%c0_155, %c0_156, %c7_157, %c0_158] : memref<1x8x8x8xf32, #tpu.memory_space<vmem>>, vector<1x8x1x8xf32>
    %171 = vector.shape_cast %170 : vector<1x8x1x8xf32> to vector<8x8xf32>
    %cst_159 = arith.constant dense<0.000000e+00> : vector<4x8xf32>
    %172 = tpu.matmul %9, %171, %cst_159 {dimension_numbers = #tpu.dot_dimension_numbers<[1], [0], [0], [1], [0, 0, 1, 1], [], []>} : vector<4x8xf32>, vector<8x8xf32>, vector<4x8xf32> -> vector<4x8xf32>
    %cst_160 = arith.constant dense<0.000000e+00> : vector<4x8xf32>
    %173 = tpu.matmul %11, %171, %cst_160 {dimension_numbers = #tpu.dot_dimension_numbers<[1], [0], [0], [1], [0, 0, 1, 1], [], []>} : vector<4x8xf32>, vector<8x8xf32>, vector<4x8xf32> -> vector<4x8xf32>
    %cst_161 = arith.constant dense<0.000000e+00> : vector<4x8xf32>
    %174 = tpu.matmul %13, %171, %cst_161 {dimension_numbers = #tpu.dot_dimension_numbers<[1], [0], [0], [1], [0, 0, 1, 1], [], []>} : vector<4x8xf32>, vector<8x8xf32>, vector<4x8xf32> -> vector<4x8xf32>
    %cst_162 = arith.constant dense<0.000000e+00> : vector<4x8xf32>
    %175 = tpu.matmul %15, %171, %cst_162 {dimension_numbers = #tpu.dot_dimension_numbers<[1], [0], [0], [1], [0, 0, 1, 1], [], []>} : vector<4x8xf32>, vector<8x8xf32>, vector<4x8xf32> -> vector<4x8xf32>
    %cst_163 = arith.constant dense<0.000000e+00> : vector<4x16xf32>
    %176 = tpu.matmul %172, %5, %cst_163 {dimension_numbers = #tpu.dot_dimension_numbers<[1], [0], [0], [1], [0, 0, 1, 1], [], []>} : vector<4x8xf32>, vector<8x16xf32>, vector<4x16xf32> -> vector<4x16xf32>
    %cst_164 = arith.constant dense<0.000000e+00> : vector<4x16xf32>
    %177 = tpu.matmul %173, %6, %cst_164 {dimension_numbers = #tpu.dot_dimension_numbers<[1], [0], [0], [1], [0, 0, 1, 1], [], []>} : vector<4x8xf32>, vector<8x16xf32>, vector<4x16xf32> -> vector<4x16xf32>
    %178 = arith.addf %176, %177 : vector<4x16xf32>
    %179 = vector.broadcast %7 : vector<4x1xf32> to vector<4x16xf32>
    %180 = arith.addf %178, %179 : vector<4x16xf32>
    %cst_165 = arith.constant dense<0.000000e+00> : vector<4x16xf32>
    %181 = tpu.matmul %174, %5, %cst_165 {dimension_numbers = #tpu.dot_dimension_numbers<[1], [0], [0], [1], [0, 0, 1, 1], [], []>} : vector<4x8xf32>, vector<8x16xf32>, vector<4x16xf32> -> vector<4x16xf32>
    %cst_166 = arith.constant dense<0.000000e+00> : vector<4x16xf32>
    %182 = tpu.matmul %175, %6, %cst_166 {dimension_numbers = #tpu.dot_dimension_numbers<[1], [0], [0], [1], [0, 0, 1, 1], [], []>} : vector<4x8xf32>, vector<8x16xf32>, vector<4x16xf32> -> vector<4x16xf32>
    %183 = arith.addf %181, %182 : vector<4x16xf32>
    %184 = vector.broadcast %7 : vector<4x1xf32> to vector<4x16xf32>
    %185 = arith.addf %183, %184 : vector<4x16xf32>
    %c0_167 = arith.constant 0 : index
    %c4_168 = arith.constant 4 : index
    %c14 = arith.constant 14 : index
    %c0_169 = arith.constant 0 : index
    %186 = vector.load %arg9[%c0_167, %c4_168, %c14, %c0_169] : memref<1x8x16x16xf32, #tpu.memory_space<vmem>>, vector<1x4x1x16xf32>
    %187 = vector.shape_cast %186 : vector<1x4x1x16xf32> to vector<4x16xf32>
    %188 = vector.shape_cast %180 : vector<4x16xf32> to vector<1x4x1x16xf32>
    tpu.vector_store %arg9[%c0_167, %c4_168, %c14, %c0_169], %188 {strides = array<i32>} : memref<1x8x16x16xf32, #tpu.memory_space<vmem>>, vector<1x4x1x16xf32>,
    %c0_170 = arith.constant 0 : index
    %c4_171 = arith.constant 4 : index
    %c15 = arith.constant 15 : index
    %c0_172 = arith.constant 0 : index
    %189 = vector.load %arg9[%c0_170, %c4_171, %c15, %c0_172] : memref<1x8x16x16xf32, #tpu.memory_space<vmem>>, vector<1x4x1x16xf32>
    %190 = vector.shape_cast %189 : vector<1x4x1x16xf32> to vector<4x16xf32>
    %191 = vector.shape_cast %185 : vector<4x16xf32> to vector<1x4x1x16xf32>
    tpu.vector_store %arg9[%c0_170, %c4_171, %c15, %c0_172], %191 {strides = array<i32>} : memref<1x8x16x16xf32, #tpu.memory_space<vmem>>, vector<1x4x1x16xf32>,
    return
  }
  func.func @transform_0(%arg0: i32, %arg1: i32, %arg2: i32) -> (i32, i32, i32, i32) {
    %c0_i32 = arith.constant 0 : i32
    %c0_i32_0 = arith.constant 0 : i32
    return %arg0, %c0_i32, %arg1, %arg2 : i32, i32, i32, i32
  }
  func.func @transform_1(%arg0: i32, %arg1: i32, %arg2: i32) -> (i32, i32, i32, i32) {
    %c0_i32 = arith.constant 0 : i32
    %c0_i32_0 = arith.constant 0 : i32
    %c0_i32_1 = arith.constant 0 : i32
    %c0_i32_2 = arith.constant 0 : i32
    %c0_i32_3 = arith.constant 0 : i32
    return %c0_i32, %c0_i32_0, %c0_i32_1, %c0_i32_2 : i32, i32, i32, i32
  }
  func.func @transform_2(%arg0: i32, %arg1: i32, %arg2: i32) -> (i32, i32) {
    %c0_i32 = arith.constant 0 : i32
    %c0_i32_0 = arith.constant 0 : i32
    %c0_i32_1 = arith.constant 0 : i32
    return %c0_i32, %c0_i32_0 : i32, i32
  }
  func.func @transform_3(%arg0: i32, %arg1: i32, %arg2: i32) -> (i32, i32) {
    %c0_i32 = arith.constant 0 : i32
    %c0_i32_0 = arith.constant 0 : i32
    %c0_i32_1 = arith.constant 0 : i32
    return %c0_i32, %c0_i32_0 : i32, i32
  }
  func.func @transform_4(%arg0: i32, %arg1: i32, %arg2: i32) -> (i32, i32) {
    %c0_i32 = arith.constant 0 : i32
    %c0_i32_0 = arith.constant 0 : i32
    %c0_i32_1 = arith.constant 0 : i32
    return %c0_i32, %c0_i32_0 : i32, i32
  }
  func.func @transform_5(%arg0: i32, %arg1: i32, %arg2: i32) -> (i32, i32, i32, i32) {
    %c0_i32 = arith.constant 0 : i32
    %c0_i32_0 = arith.constant 0 : i32
    return %arg0, %c0_i32, %arg1, %arg2 : i32, i32, i32, i32
  }
  func.func @transform_6(%arg0: i32, %arg1: i32, %arg2: i32) -> (i32, i32, i32, i32) {
    %c0_i32 = arith.constant 0 : i32
    %c0_i32_0 = arith.constant 0 : i32
    return %arg0, %c0_i32, %arg1, %arg2 : i32, i32, i32, i32
  }
}

</mosaic_0001>

<llo_original>
// kernel: up_concat.1
$region0: #{up_concat.1}
  #allocation0 [shape = 'u32[]', space=smem, size = 0x4, offset = 0x4, fixed_abs, tag = 'smem constant byte address 0x4 - core index']
  #allocation1 [shape = 'u32[72,128]{1,0:T(1,128)}', space=vmem, size = 0x9000, scoped, tag = 'internal scratch']
  %s0 = inlined_call_operand.hbm [shape: f32[2,8,8,8], index: 0, kind: input, shape index: {}]
  %s1 = inlined_call_operand.vmem [shape: f32[2,2,4,8], index: 1, kind: input, shape index: {}]
  %s2 = inlined_call_operand.vmem [shape: f32[4,1], index: 2, kind: input, shape index: {}]
  %s3 = inlined_call_operand.vmem [shape: f32[8,16], index: 3, kind: input, shape index: {}]
  %s4 = inlined_call_operand.vmem [shape: f32[8,16], index: 4, kind: input, shape index: {}]
  %s5 = inlined_call_operand.hbm [shape: f32[2,4,16,16], index: 5, kind: input, shape index: {}]
  %s6 = inlined_call_operand.hbm [shape: f32[2,8,16,16], index: 6, kind: output, shape index: {}]
  %s7 = sld [smem:[#allocation0]]
  $region65: #{up_concat.1} parent=0
    _
  %s9 = ssub.s32 1, %s7
  %s10 = scalar_select 0, %s9, %s7
  $region1: #{up_concat.1} parent=0
    #allocation2 [shape = 'u8[65536]{0}', space=vmem, size = 0x10000, scoped, tag = 'input window, operand 0']
    #allocation3 [shape = 's32[2]{0}', space=sflag, size = 0x8, scoped, tag = 'scoped memory for up_concat.1']
    #allocation4 [shape = 's32[2]{0}', space=sflag, size = 0x8, scoped, tag = 'scoped memory for up_concat.1']
    #allocation5 [shape = 'u8[65536]{0}', space=vmem, size = 0x10000, scoped, tag = 'input window, operand 5']
    #allocation6 [shape = 's32[2]{0}', space=sflag, size = 0x8, scoped, tag = 'scoped memory for up_concat.1']
    #allocation7 [shape = 'u8[131072]{0}', space=vmem, size = 0x20000, scoped, tag = 'output window, operand 0']
    %11 = vsyncpa [#allocation3], 0
    %s12 = scalar_lea.sflag [#allocation3], 1
    %13 = vsyncpa %s12, 0
    %14 = vsyncpa [#allocation6], 0
    %s15 = scalar_lea.sflag [#allocation6], 1
    %16 = vsyncpa %s15, 0
    %17 = vsyncpa [#allocation4], 0
    %s18 = scalar_lea.sflag [#allocation4], 1
    %19 = vsyncpa %s18, 0
    loop: start=0, step=1, limit=4
    $region2: #{up_concat.1} parent=1 // loop_pre_header
      _
    $region3: #{up_concat.1} parent=1 // loop_header
      %s21 = sphi 0, %s25
      %p22 = scmp.ge.s32.totalorder %s21, 4
      %s28 = sphi 0, %s47
      %s29 = sphi 0, %s43
      %s30 = sphi 0, %s39
      %s31 = sphi 0, %s28
      %s32 = sphi 0, %s29
      %s33 = sphi 0, %s30
      %s34 = sphi 0, %s31
      %s35 = sphi 0, %s32
      %s36 = sphi 0, %s33
      %s54 = sphi 0, %s56
      %s57 = sphi 0, %s54
      %s58 = sphi 0, %s57
      %s74 = sphi 0, %s58
      %s78 = sphi 0, %s78
      %s80 = sphi 0, %s78
      %s81 = sphi 0, %s80
      %s95 = sphi 0, %s81
      %s99 = sphi 0, %s99
      %s101 = sphi 0, %s99
      %s102 = sphi 0, %s101
      %s116 = sphi 0, %s102
      %s120 = sphi 0, %s120
      %s122 = sphi 0, %s120
      %s123 = sphi 0, %s122
      %s137 = sphi 0, %s123
      %s141 = sphi 0, %s141
      %s143 = sphi 0, %s141
      %s144 = sphi 0, %s143
      %s158 = sphi 0, %s144
      %s168 = sphi 0, %s170
      %s171 = sphi 0, %s168
      %s172 = sphi 0, %s171
      %s188 = sphi 0, %s172
      %s198 = sphi 0, %s200
      %s201 = sphi 0, %s198
      %s202 = sphi 0, %s201
      %s218 = sphi 0, %s202
    $region4: #{up_concat.1} parent=1 // loop_header_branch
      %24 = sbr.rel (%p22) target = $region8
    $region5: #{up_concat.1} parent=1 // loop_body
      %s26 = ssub.s32 %s21, 1
      %s27 = ssub.s32 %s21, 2
      %s37 = sadd.s32 1, %s30
      %p38 = scmp.ge.s32.totalorder %s37, 1
      %s39 = scalar_select %p38, 0, %s37
      %s40 = sadd.s32 1, %s29
      %s41 = scalar_select %p38, %s40, %s29
      %p42 = scmp.ge.s32.totalorder %s41, 1
      %s43 = scalar_select %p42, 0, %s41
      %s44 = sadd.s32 1, %s28
      %s45 = scalar_select %p42, %s44, %s28
      %p46 = scmp.ge.s32.totalorder %s45, 2
      %s47 = scalar_select %p46, 0, %s45
      %s48 = ssub.s32 %s28, %s47
      %s49 = ssub.s32 %s29, %s43
      %s50 = sor.u32 %s48, %s49
      %s51 = ssub.s32 %s30, %s39
      %s52 = sor.u32 %s50, %s51
      %p53 = scmp.eq.s32.totalorder %s52, 0
      %s55 = sadd.s32 %s54, 1
      %s56 = scalar_select %p53, %s54, %s55
      %p59 = pneg %p53
      %p60 = scmp.eq.s32.totalorder %s21, 1
      %p61 = por %p59, %p60
      %p62 = scmp.ne.s32.totalorder %s54, %s57
      %p63 = scmp.eq.s32.totalorder %s21, 0
      %p64 = por %p62, %p63
      %p65 = scmp.ne.s32.totalorder %s54, %s57
      %p66 = scmp.eq.s32.totalorder %s26, 1
      %p67 = por %p65, %p66
      %p68 = scmp.ne.s32.totalorder %s57, %s58
      %p69 = scmp.eq.s32.totalorder %s26, 0
      %p70 = por %p68, %p69
      %p71 = scmp.ne.s32.totalorder %s57, %s58
      %p72 = scmp.eq.s32.totalorder %s27, 1
      %p73 = por %p71, %p72
      %p75 = scmp.ne.s32.totalorder %s58, %s74
      %p76 = scmp.eq.s32.totalorder %s27, 0
      %p77 = por %p75, %p76
      %s79 = sadd.s32 %s78, 1
      %p82 = scmp.eq.s32.totalorder %s21, 1
      %p83 = scmp.ne.s32.totalorder %s78, %s80
      %p84 = scmp.eq.s32.totalorder %s21, 0
      %p85 = por %p83, %p84
      %p86 = scmp.ne.s32.totalorder %s78, %s80
      %p87 = scmp.eq.s32.totalorder %s26, 1
      %p88 = por %p86, %p87
      %p89 = scmp.ne.s32.totalorder %s80, %s81
      %p90 = scmp.eq.s32.totalorder %s26, 0
      %p91 = por %p89, %p90
      %p92 = scmp.ne.s32.totalorder %s80, %s81
      %p93 = scmp.eq.s32.totalorder %s27, 1
      %p94 = por %p92, %p93
      %p96 = scmp.ne.s32.totalorder %s81, %s95
      %p97 = scmp.eq.s32.totalorder %s27, 0
      %p98 = por %p96, %p97
      %s100 = sadd.s32 %s99, 1
      %p103 = scmp.eq.s32.totalorder %s21, 1
      %p104 = scmp.ne.s32.totalorder %s99, %s101
      %p105 = scmp.eq.s32.totalorder %s21, 0
      %p106 = por %p104, %p105
      %p107 = scmp.ne.s32.totalorder %s99, %s101
      %p108 = scmp.eq.s32.totalorder %s26, 1
      %p109 = por %p107, %p108
      %p110 = scmp.ne.s32.totalorder %s101, %s102
      %p111 = scmp.eq.s32.totalorder %s26, 0
      %p112 = por %p110, %p111
      %p113 = scmp.ne.s32.totalorder %s101, %s102
      %p114 = scmp.eq.s32.totalorder %s27, 1
      %p115 = por %p113, %p114
      %p117 = scmp.ne.s32.totalorder %s102, %s116
      %p118 = scmp.eq.s32.totalorder %s27, 0
      %p119 = por %p117, %p118
      %s121 = sadd.s32 %s120, 1
      %p124 = scmp.eq.s32.totalorder %s21, 1
      %p125 = scmp.ne.s32.totalorder %s120, %s122
      %p126 = scmp.eq.s32.totalorder %s21, 0
      %p127 = por %p125, %p126
      %p128 = scmp.ne.s32.totalorder %s120, %s122
      %p129 = scmp.eq.s32.totalorder %s26, 1
      %p130 = por %p128, %p129
      %p131 = scmp.ne.s32.totalorder %s122, %s123
      %p132 = scmp.eq.s32.totalorder %s26, 0
      %p133 = por %p131, %p132
      %p134 = scmp.ne.s32.totalorder %s122, %s123
      %p135 = scmp.eq.s32.totalorder %s27, 1
      %p136 = por %p134, %p135
      %p138 = scmp.ne.s32.totalorder %s123, %s137
      %p139 = scmp.eq.s32.totalorder %s27, 0
      %p140 = por %p138, %p139
      %s142 = sadd.s32 %s141, 1
      %p145 = scmp.eq.s32.totalorder %s21, 1
      %p146 = scmp.ne.s32.totalorder %s141, %s143
      %p147 = scmp.eq.s32.totalorder %s21, 0
      %p148 = por %p146, %p147
      %p149 = scmp.ne.s32.totalorder %s141, %s143
      %p150 = scmp.eq.s32.totalorder %s26, 1
      %p151 = por %p149, %p150
      %p152 = scmp.ne.s32.totalorder %s143, %s144
      %p153 = scmp.eq.s32.totalorder %s26, 0
      %p154 = por %p152, %p153
      %p155 = scmp.ne.s32.totalorder %s143, %s144
      %p156 = scmp.eq.s32.totalorder %s27, 1
      %p157 = por %p155, %p156
      %p159 = scmp.ne.s32.totalorder %s144, %s158
      %p160 = scmp.eq.s32.totalorder %s27, 0
      %p161 = por %p159, %p160
      %s162 = ssub.s32 %s28, %s47
      %s163 = ssub.s32 %s29, %s43
      %s164 = sor.u32 %s162, %s163
      %s165 = ssub.s32 %s30, %s39
      %s166 = sor.u32 %s164, %s165
      %p167 = scmp.eq.s32.totalorder %s166, 0
      %s169 = sadd.s32 %s168, 1
      %s170 = scalar_select %p167, %s168, %s169
      %p173 = pneg %p167
      %p174 = scmp.eq.s32.totalorder %s21, 1
      %p175 = por %p173, %p174
      %p176 = scmp.ne.s32.totalorder %s168, %s171
      %p177 = scmp.eq.s32.totalorder %s21, 0
      %p178 = por %p176, %p177
      %p179 = scmp.ne.s32.totalorder %s168, %s171
      %p180 = scmp.eq.s32.totalorder %s26, 1
      %p181 = por %p179, %p180
      %p182 = scmp.ne.s32.totalorder %s171, %s172
      %p183 = scmp.eq.s32.totalorder %s26, 0
      %p184 = por %p182, %p183
      %p185 = scmp.ne.s32.totalorder %s171, %s172
      %p186 = scmp.eq.s32.totalorder %s27, 1
      %p187 = por %p185, %p186
      %p189 = scmp.ne.s32.totalorder %s172, %s188
      %p190 = scmp.eq.s32.totalorder %s27, 0
      %p191 = por %p189, %p190
      %s192 = ssub.s32 %s28, %s47
      %s193 = ssub.s32 %s29, %s43
      %s194 = sor.u32 %s192, %s193
      %s195 = ssub.s32 %s30, %s39
      %s196 = sor.u32 %s194, %s195
      %p197 = scmp.eq.s32.totalorder %s196, 0
      %s199 = sadd.s32 %s198, 1
      %s200 = scalar_select %p197, %s198, %s199
      %p203 = pneg %p197
      %p204 = scmp.eq.s32.totalorder %s21, 1
      %p205 = por %p203, %p204
      %p206 = scmp.ne.s32.totalorder %s198, %s201
      %p207 = scmp.eq.s32.totalorder %s21, 0
      %p208 = por %p206, %p207
      %p209 = scmp.ne.s32.totalorder %s198, %s201
      %p210 = scmp.eq.s32.totalorder %s26, 1
      %p211 = por %p209, %p210
      %p212 = scmp.ne.s32.totalorder %s201, %s202
      %p213 = scmp.eq.s32.totalorder %s26, 0
      %p214 = por %p212, %p213
      %p215 = scmp.ne.s32.totalorder %s201, %s202
      %p216 = scmp.eq.s32.totalorder %s27, 1
      %p217 = por %p215, %p216
      %p219 = scmp.ne.s32.totalorder %s202, %s218
      %p220 = scmp.eq.s32.totalorder %s27, 0
      %p221 = por %p219, %p220
      %p222 = scmp.le.s32.totalorder 1, %s21
      %p223 = scmp.lt.s32.totalorder %s21, 3
      %p224 = pnand %p222, %p223
      %p225 = pneg %p224
      // Predicated region
      $region9: #{up_concat.1} parent=5 // pred_check
        _
      $region10: #{up_concat.1} parent=5 // pred_check_branch
        %227 = sbr.rel (%p224) target = $region12
      $region11: #{up_concat.1} parent=5 // pred_region
        %s228 = ssub.s32 %s21, 1
        // Predicated region
        $region13: #{up_concat.1} parent=11 // pred_check
          %p229 = pneg %p91
        $region14: #{up_concat.1} parent=11 // pred_check_branch
          %231 = sbr.rel (%p229) target = $region16
        $region15: #{up_concat.1} parent=11 // pred_region
          _
        $region16: #{up_concat.1} parent=11 // pred_fallthru
          _
        // Predicated region
        $region17: #{up_concat.1} parent=11 // pred_check
          %p232 = pneg %p112
        $region18: #{up_concat.1} parent=11 // pred_check_branch
          %234 = sbr.rel (%p232) target = $region20
        $region19: #{up_concat.1} parent=11 // pred_region
          _
        $region20: #{up_concat.1} parent=11 // pred_fallthru
          _
        // Predicated region
        $region21: #{up_concat.1} parent=11 // pred_check
          %p235 = pneg %p133
        $region22: #{up_concat.1} parent=11 // pred_check_branch
          %237 = sbr.rel (%p235) target = $region24
        $region23: #{up_concat.1} parent=11 // pred_region
          _
        $region24: #{up_concat.1} parent=11 // pred_fallthru
          _
        // Predicated region
        $region25: #{up_concat.1} parent=11 // pred_check
          %p238 = pneg %p154
        $region26: #{up_concat.1} parent=11 // pred_check_branch
          %240 = sbr.rel (%p238) target = $region28
        $region27: #{up_concat.1} parent=11 // pred_region
          _
        $region28: #{up_concat.1} parent=11 // pred_fallthru
          _
      $region12: #{up_concat.1} parent=5 // pred_fallthru
        _
      %p241 = scmp.lt.s32.totalorder %s21, 2
      // Predicated region
      $region29: #{up_concat.1} parent=5 // pred_check
        %p242 = pneg %p241
      $region30: #{up_concat.1} parent=5 // pred_check_branch
        %244 = sbr.rel (%p242) target = $region32
      $region31: #{up_concat.1} parent=5 // pred_region
        // Predicated region
        $region33: #{up_concat.1} parent=31 // pred_check
          %p245 = pneg %p64
        $region34: #{up_concat.1} parent=31 // pred_check_branch
          %247 = sbr.rel (%p245) target = $region36
        $region35: #{up_concat.1} parent=31 // pred_region
          %s248 = sand.u32 %s54, 1
          %s249 = scalar_lea.sflag [#allocation3], %s248
          %s250 = sand.u32 %s54, 1
          %s251 = smul.addr %s250, 64
          %s252 = scalar_lea.vmem [#allocation2], %s251
          %254 = vsyncadd %s249, 0
          %s255 = sadd.s32 %s30, %s29
          %s256 = smul.addr %s28, 8
          %s257 = sadd.s32 %s255, %s256
          %s258 = smul.addr %s257, 8
          %s259 = scalar_lea.hbm %s0, %s258
          %s260 = sshll.u32 %s259, 4
          %s261 = int_to_ptr.hbm [resolvable:$true] %s260
          %s262 = sshll.u32 %s252, 4
          %s263 = int_to_ptr.vmem [resolvable:$true] %s262
          %268 = dma.hbm_to_vmem [thread:$0]  %s261, 1024, %s263, %s249, 128, 128, 8
        $region36: #{up_concat.1} parent=31 // pred_fallthru
          _
        // Predicated region
        $region37: #{up_concat.1} parent=31 // pred_check
          %p269 = pneg %p178
        $region38: #{up_concat.1} parent=31 // pred_check_branch
          %271 = sbr.rel (%p269) target = $region40
        $region39: #{up_concat.1} parent=31 // pred_region
          %s272 = sand.u32 %s168, 1
          %s273 = scalar_lea.sflag [#allocation6], %s272
          %s274 = sand.u32 %s168, 1
          %s275 = smul.addr %s274, 64
          %s276 = scalar_lea.vmem [#allocation5], %s275
          %s277 = smul.u32 2, %s29
          %279 = vsyncadd %s273, 0
          %s280 = sadd.s32 %s30, %s277
          %s281 = smul.addr %s28, 8
          %s282 = sadd.s32 %s280, %s281
          %s283 = smul.addr %s282, 8
          %s284 = scalar_lea.hbm %s5, %s283
          %s285 = sshll.u32 %s284, 4
          %s286 = int_to_ptr.hbm [resolvable:$true] %s285
          %s287 = sshll.u32 %s276, 4
          %s288 = int_to_ptr.vmem [resolvable:$true] %s287
          %293 = dma.hbm_to_vmem [thread:$0]  %s286, 1024, %s288, %s273, 128, 128, 8
        $region40: #{up_concat.1} parent=31 // pred_fallthru
          _
      $region32: #{up_concat.1} parent=5 // pred_fallthru
        _
      %p294 = scmp.le.s32.totalorder 1, %s21
      %p295 = scmp.lt.s32.totalorder %s21, 3
      %p296 = pnand %p294, %p295
      %p297 = pneg %p296
      // Predicated region
      $region41: #{up_concat.1} parent=5 // pred_check
        _
      $region42: #{up_concat.1} parent=5 // pred_check_branch
        %299 = sbr.rel (%p296) target = $region44
      $region43: #{up_concat.1} parent=5 // pred_region
        %s300 = ssub.s32 %s21, 1
        %s301 = sand.u32 %s57, 1
        %s302 = scalar_lea.sflag [#allocation3], %s301
        %s303 = sand.u32 %s57, 1
        %s304 = smul.addr %s303, 64
        %s305 = scalar_lea.vmem [#allocation2], %s304
        // Predicated region
        $region45: #{up_concat.1} parent=43 // pred_check
          %p306 = pneg %p70
        $region46: #{up_concat.1} parent=43 // pred_check_branch
          %308 = sbr.rel (%p306) target = $region48
        $region47: #{up_concat.1} parent=43 // pred_region
          %310 = dma.done %s302, 1024
        $region48: #{up_concat.1} parent=43 // pred_fallthru
          _
        %s311 = sand.u32 %s171, 1
        %s312 = scalar_lea.sflag [#allocation6], %s311
        %s313 = sand.u32 %s171, 1
        %s314 = smul.addr %s313, 64
        %s315 = scalar_lea.vmem [#allocation5], %s314
        // Predicated region
        $region49: #{up_concat.1} parent=43 // pred_check
          %p316 = pneg %p184
        $region50: #{up_concat.1} parent=43 // pred_check_branch
          %318 = sbr.rel (%p316) target = $region52
        $region51: #{up_concat.1} parent=43 // pred_region
          %320 = dma.done %s312, 1024
        $region52: #{up_concat.1} parent=43 // pred_fallthru
          _
        %s321 = sand.u32 %s57, 1
        %s322 = scalar_lea.sflag [#allocation3], %s321
        %s323 = sand.u32 %s57, 1
        %s324 = smul.addr %s323, 64
        %s325 = scalar_lea.vmem [#allocation2], %s324
        %p326 = pneg %p70
        %p327 = pneg %p67
        %p328 = pneg %p91
        %p329 = pneg %p88
        %p330 = pneg %p112
        %p331 = pneg %p109
        %p332 = pneg %p133
        %p333 = pneg %p130
        %p334 = pneg %p154
        %p335 = pneg %p151
        %s336 = sand.u32 %s171, 1
        %s337 = scalar_lea.sflag [#allocation6], %s336
        %s338 = sand.u32 %s171, 1
        %s339 = smul.addr %s338, 64
        %s340 = scalar_lea.vmem [#allocation5], %s339
        %p341 = pneg %p184
        %p342 = pneg %p181
        %p343 = pneg %p214
        %p344 = pneg %p211
        %s345 = sand.u32 %s201, 1
        %s346 = scalar_lea.sflag [#allocation4], %s345
        %s347 = sand.u32 %s201, 1
        %s348 = smul.addr %s347, 128
        %s349 = scalar_lea.vmem [#allocation7], %s348
        %s350 = smul.u32 2, %s32
        %s351 = smul.u32 2, %s32
        %v352 = vld [vmem:[%s315] sm:$0xff]
        %v353 = vld [vmem:[%s315 + $0x8] sm:$0xff]
        %v354 = vld [vmem:[%s315 + $0x10] sm:$0xff]
        %v355 = vld [vmem:[%s315 + $0x18] sm:$0xff]
        %v356 = vld [vmem:[%s315 + $0x20] sm:$0xff]
        %v357 = vld [vmem:[%s315 + $0x28] sm:$0xff]
        %v358 = vld [vmem:[%s315 + $0x30] sm:$0xff]
        %v359 = vld [vmem:[%s315 + $0x38] sm:$0xff]
        %vm360 = vcmask 130048
        %361 = vst.msk [vmem:[%s349] sm:$0xff] %vm360, %v352
        %362 = vst.msk [vmem:[%s349 + $0x8] sm:$0xff] %vm360, %v353
        %363 = vst.msk [vmem:[%s349 + $0x10] sm:$0xff] %vm360, %v354
        %364 = vst.msk [vmem:[%s349 + $0x18] sm:$0xff] %vm360, %v355
        %365 = vst.msk [vmem:[%s349 + $0x20] sm:$0xff] %vm360, %v356
        %366 = vst.msk [vmem:[%s349 + $0x28] sm:$0xff] %vm360, %v357
        %367 = vst.msk [vmem:[%s349 + $0x30] sm:$0xff] %vm360, %v358
        %368 = vst.msk [vmem:[%s349 + $0x38] sm:$0xff] %vm360, %v359
        %v369 = vld [vmem:[%s3] sm:$0xff]
        %v370 = vld [vmem:[%s4] sm:$0xff]
        %v371 = vld [vmem:[%s2] sm:$0xf]
        %v372 = vld [vmem:[%s1] sm:$0xf]
        %s373 = scalar_lea.vmem %s1, 4
        %v374 = vld [vmem:[%s373] sm:$0xf]
        %s375 = scalar_lea.vmem %s1, 8
        %v376 = vld [vmem:[%s375] sm:$0xf]
        %s377 = scalar_lea.vmem %s1, 12
        %v378 = vld [vmem:[%s377] sm:$0xf]
        %v379 = vld [vmem:[%s305] sm:$0x1]
        %v380 = vld [vmem:[%s305 + $0x8] sm:$0x1]
        %v381 = vld [vmem:[%s305 + $0x10] sm:$0x1]
        %v382 = vld [vmem:[%s305 + $0x18] sm:$0x1]
        %v383 = vld [vmem:[%s305 + $0x20] sm:$0x1]
        %v384 = vld [vmem:[%s305 + $0x28] sm:$0x1]
        %v385 = vld [vmem:[%s305 + $0x30] sm:$0x1]
        %v386 = vld [vmem:[%s305 + $0x38] sm:$0x1]
        %v395 = vrot.slane %v380, 7
        %vm396 = vcmask 1041409
        %v397 = vsel %vm396, %v395, %v379
        %v398 = vrot.slane %v381, 6
        %vm399 = vcmask 1042434
        %v400 = vsel %vm399, %v398, %v397
        %v401 = vrot.slane %v382, 5
        %vm402 = vcmask 1043459
        %v403 = vsel %vm402, %v401, %v400
        %v404 = vrot.slane %v383, 4
        %vm405 = vcmask 1044484
        %v406 = vsel %vm405, %v404, %v403
        %v407 = vrot.slane %v384, 3
        %vm408 = vcmask 1045509
        %v409 = vsel %vm408, %v407, %v406
        %v410 = vrot.slane %v385, 2
        %vm411 = vcmask 1046534
        %v412 = vsel %vm411, %v410, %v409
        %v413 = vrot.slane %v386, 1
        %vm414 = vcmask 1047559
        %v415 = vsel %vm414, %v413, %v412
        %vm417 = vcmask 64512
        %v419 = vsel %vm417, %v372, 0
        %421 = vmatpush.msra.mxu0 0.0
        %422 = vmatpush.msra.mxu0 0.0
        %423 = vmatpush.msra.mxu0 0.0
        %424 = vmatpush.msra.mxu0 0.0
        %425 = vmatpush.msra.mxu0 0.0
        %426 = vmatpush.msra.mxu0 0.0
        %427 = vmatpush.msra.mxu0 0.0
        %428 = vmatpush.msra.mxu0 0.0
        %429 = vmatpush.msra.mxu0 0.0
        %430 = vmatpush.msra.mxu0 0.0
        %431 = vmatpush.msra.mxu0 0.0
        %432 = vmatpush.msra.mxu0 0.0
        %433 = vmatpush.msra.mxu0 0.0
        %434 = vmatpush.msra.mxu0 0.0
        %435 = vmatpush.msra.mxu0 0.0
        %436 = vmatpush.msra.mxu0 %v415
        %437 = vmatmul.f32.gmra.mxu0 %v419
        %v438 = vpop.f32.mrf.mxu0
        %v439 = vadd.f32 0.0, %v438
        %440 = vdwg.mxu0
        %v442 = vsel %vm417, %v374, 0
        %444 = vmatpush.msra.mxu0 0.0
        %445 = vmatpush.msra.mxu0 0.0
        %446 = vmatpush.msra.mxu0 0.0
        %447 = vmatpush.msra.mxu0 0.0
        %448 = vmatpush.msra.mxu0 0.0
        %449 = vmatpush.msra.mxu0 0.0
        %450 = vmatpush.msra.mxu0 0.0
        %451 = vmatpush.msra.mxu0 0.0
        %452 = vmatpush.msra.mxu0 0.0
        %453 = vmatpush.msra.mxu0 0.0
        %454 = vmatpush.msra.mxu0 0.0
        %455 = vmatpush.msra.mxu0 0.0
        %456 = vmatpush.msra.mxu0 0.0
        %457 = vmatpush.msra.mxu0 0.0
        %458 = vmatpush.msra.mxu0 0.0
        %459 = vmatpush.msra.mxu0 %v415
        %460 = vmatmul.f32.gmra.mxu0 %v442
        %v461 = vpop.f32.mrf.mxu0
        %v462 = vadd.f32 0.0, %v461
        %463 = vdwg.mxu0
        %v465 = vsel %vm417, %v376, 0
        %467 = vmatpush.msra.mxu0 0.0
        %468 = vmatpush.msra.mxu0 0.0
        %469 = vmatpush.msra.mxu0 0.0
        %470 = vmatpush.msra.mxu0 0.0
        %471 = vmatpush.msra.mxu0 0.0
        %472 = vmatpush.msra.mxu0 0.0
        %473 = vmatpush.msra.mxu0 0.0
        %474 = vmatpush.msra.mxu0 0.0
        %475 = vmatpush.msra.mxu0 0.0
        %476 = vmatpush.msra.mxu0 0.0
        %477 = vmatpush.msra.mxu0 0.0
        %478 = vmatpush.msra.mxu0 0.0
        %479 = vmatpush.msra.mxu0 0.0
        %480 = vmatpush.msra.mxu0 0.0
        %481 = vmatpush.msra.mxu0 0.0
        %482 = vmatpush.msra.mxu0 %v415
        %483 = vmatmul.f32.gmra.mxu0 %v465
        %v484 = vpop.f32.mrf.mxu0
        %v485 = vadd.f32 0.0, %v484
        %486 = vdwg.mxu0
        %v488 = vsel %vm417, %v378, 0
        %490 = vmatpush.msra.mxu0 0.0
        %491 = vmatpush.msra.mxu0 0.0
        %492 = vmatpush.msra.mxu0 0.0
        %493 = vmatpush.msra.mxu0 0.0
        %494 = vmatpush.msra.mxu0 0.0
        %495 = vmatpush.msra.mxu0 0.0
        %496 = vmatpush.msra.mxu0 0.0
        %497 = vmatpush.msra.mxu0 0.0
        %498 = vmatpush.msra.mxu0 0.0
        %499 = vmatpush.msra.mxu0 0.0
        %500 = vmatpush.msra.mxu0 0.0
        %501 = vmatpush.msra.mxu0 0.0
        %502 = vmatpush.msra.mxu0 0.0
        %503 = vmatpush.msra.mxu0 0.0
        %504 = vmatpush.msra.mxu0 0.0
        %505 = vmatpush.msra.mxu0 %v415
        %506 = vmatmul.f32.gmra.mxu0 %v488
        %v507 = vpop.f32.mrf.mxu0
        %v508 = vadd.f32 0.0, %v507
        %509 = vdwg.mxu0
        %v511 = vsel %vm417, %v462, 0
        %513 = vmatpush.msra.mxu0 0.0
        %514 = vmatpush.msra.mxu0 0.0
        %515 = vmatpush.msra.mxu0 0.0
        %516 = vmatpush.msra.mxu0 0.0
        %517 = vmatpush.msra.mxu0 0.0
        %518 = vmatpush.msra.mxu0 0.0
        %519 = vmatpush.msra.mxu0 0.0
        %520 = vmatpush.msra.mxu0 0.0
        %521 = vmatpush.msra.mxu0 0.0
        %522 = vmatpush.msra.mxu0 0.0
        %523 = vmatpush.msra.mxu0 0.0
        %524 = vmatpush.msra.mxu0 0.0
        %525 = vmatpush.msra.mxu0 0.0
        %526 = vmatpush.msra.mxu0 0.0
        %527 = vmatpush.msra.mxu0 0.0
        %528 = vmatpush.msra.mxu0 %v370
        %529 = vmatmul.f32.gmra.mxu0 %v511
        %v530 = vpop.f32.mrf.mxu0
        %v531 = vadd.f32 0.0, %v530
        %532 = vdwg.mxu0
        %v534 = vsel %vm417, %v439, 0
        %536 = vmatpush.msra.mxu0 0.0
        %537 = vmatpush.msra.mxu0 0.0
        %538 = vmatpush.msra.mxu0 0.0
        %539 = vmatpush.msra.mxu0 0.0
        %540 = vmatpush.msra.mxu0 0.0
        %541 = vmatpush.msra.mxu0 0.0
        %542 = vmatpush.msra.mxu0 0.0
        %543 = vmatpush.msra.mxu0 0.0
        %544 = vmatpush.msra.mxu0 0.0
        %545 = vmatpush.msra.mxu0 0.0
        %546 = vmatpush.msra.mxu0 0.0
        %547 = vmatpush.msra.mxu0 0.0
        %548 = vmatpush.msra.mxu0 0.0
        %549 = vmatpush.msra.mxu0 0.0
        %550 = vmatpush.msra.mxu0 0.0
        %551 = vmatpush.msra.mxu0 %v369
        %552 = vmatmul.f32.gmra.mxu0 %v534
        %v553 = vpop.f32.mrf.mxu0
        %v554 = vadd.f32 %v531, %v553
        %555 = vdwg.mxu0
        %557 = vset.pattern.permute.xlu0 0
        %558 = vperm.xlu0 %557, %v371
        %v559 = vpop.permute.xlu0 %558
        %v561 = vadd.f32 %v554, %v559
        %v563 = vsel %vm417, %v508, 0
        %565 = vmatpush.msra.mxu0 0.0
        %566 = vmatpush.msra.mxu0 0.0
        %567 = vmatpush.msra.mxu0 0.0
        %568 = vmatpush.msra.mxu0 0.0
        %569 = vmatpush.msra.mxu0 0.0
        %570 = vmatpush.msra.mxu0 0.0
        %571 = vmatpush.msra.mxu0 0.0
        %572 = vmatpush.msra.mxu0 0.0
        %573 = vmatpush.msra.mxu0 0.0
        %574 = vmatpush.msra.mxu0 0.0
        %575 = vmatpush.msra.mxu0 0.0
        %576 = vmatpush.msra.mxu0 0.0
        %577 = vmatpush.msra.mxu0 0.0
        %578 = vmatpush.msra.mxu0 0.0
        %579 = vmatpush.msra.mxu0 0.0
        %580 = vmatpush.msra.mxu0 %v370
        %581 = vmatmul.f32.gmra.mxu0 %v563
        %v582 = vpop.f32.mrf.mxu0
        %v583 = vadd.f32 0.0, %v582
        %584 = vdwg.mxu0
        %v586 = vsel %vm417, %v485, 0
        %588 = vmatpush.msra.mxu0 0.0
        %589 = vmatpush.msra.mxu0 0.0
        %590 = vmatpush.msra.mxu0 0.0
        %591 = vmatpush.msra.mxu0 0.0
        %592 = vmatpush.msra.mxu0 0.0
        %593 = vmatpush.msra.mxu0 0.0
        %594 = vmatpush.msra.mxu0 0.0
        %595 = vmatpush.msra.mxu0 0.0
        %596 = vmatpush.msra.mxu0 0.0
        %597 = vmatpush.msra.mxu0 0.0
        %598 = vmatpush.msra.mxu0 0.0
        %599 = vmatpush.msra.mxu0 0.0
        %600 = vmatpush.msra.mxu0 0.0
        %601 = vmatpush.msra.mxu0 0.0
        %602 = vmatpush.msra.mxu0 0.0
        %603 = vmatpush.msra.mxu0 %v369
        %604 = vmatmul.f32.gmra.mxu0 %v586
        %v605 = vpop.f32.mrf.mxu0
        %v606 = vadd.f32 %v583, %v605
        %607 = vdwg.mxu0
        %v608 = vadd.f32 %v606, %v559
        %v610 = vrot.slane %v561, 1
        %v611 = vrot.slane %v561, 2
        %v612 = vrot.slane %v561, 3
        %s616 = scalar_lea.vmem %s349, 64 [#allocation7]
        %vm617 = vcmask 122880
        %618 = vst.msk [vmem:[%s616] sm:$0x1] %vm617, %v561
        %619 = vst.msk [vmem:[%s616 + $0x10] sm:$0x1] %vm617, %v610
        %620 = vst.msk [vmem:[%s616 + $0x20] sm:$0x1] %vm617, %v611
        %621 = vst.msk [vmem:[%s616 + $0x30] sm:$0x1] %vm617, %v612
        %v623 = vrot.slane %v608, 1
        %v624 = vrot.slane %v608, 2
        %v625 = vrot.slane %v608, 3
        %629 = vst.msk [vmem:[%s616 + $0x1] sm:$0x1] %vm617, %v608
        %630 = vst.msk [vmem:[%s616 + $0x11] sm:$0x1] %vm617, %v623
        %631 = vst.msk [vmem:[%s616 + $0x21] sm:$0x1] %vm617, %v624
        %632 = vst.msk [vmem:[%s616 + $0x31] sm:$0x1] %vm617, %v625
        %v633 = vld [vmem:[%s305 + $0x1] sm:$0x1]
        %v634 = vld [vmem:[%s305 + $0x9] sm:$0x1]
        %v635 = vld [vmem:[%s305 + $0x11] sm:$0x1]
        %v636 = vld [vmem:[%s305 + $0x19] sm:$0x1]
        %v637 = vld [vmem:[%s305 + $0x21] sm:$0x1]
        %v638 = vld [vmem:[%s305 + $0x29] sm:$0x1]
        %v639 = vld [vmem:[%s305 + $0x31] sm:$0x1]
        %v640 = vld [vmem:[%s305 + $0x39] sm:$0x1]
        %v649 = vrot.slane %v634, 7
        %v650 = vsel %vm396, %v649, %v633
        %v651 = vrot.slane %v635, 6
        %v652 = vsel %vm399, %v651, %v650
        %v653 = vrot.slane %v636, 5
        %v654 = vsel %vm402, %v653, %v652
        %v655 = vrot.slane %v637, 4
        %v656 = vsel %vm405, %v655, %v654
        %v657 = vrot.slane %v638, 3
        %v658 = vsel %vm408, %v657, %v656
        %v659 = vrot.slane %v639, 2
        %v660 = vsel %vm411, %v659, %v658
        %v661 = vrot.slane %v640, 1
        %v662 = vsel %vm414, %v661, %v660
        %664 = vmatpush.msra.mxu0 0.0
        %665 = vmatpush.msra.mxu0 0.0
        %666 = vmatpush.msra.mxu0 0.0
        %667 = vmatpush.msra.mxu0 0.0
        %668 = vmatpush.msra.mxu0 0.0
        %669 = vmatpush.msra.mxu0 0.0
        %670 = vmatpush.msra.mxu0 0.0
        %671 = vmatpush.msra.mxu0 0.0
        %672 = vmatpush.msra.mxu0 0.0
        %673 = vmatpush.msra.mxu0 0.0
        %674 = vmatpush.msra.mxu0 0.0
        %675 = vmatpush.msra.mxu0 0.0
        %676 = vmatpush.msra.mxu0 0.0
        %677 = vmatpush.msra.mxu0 0.0
        %678 = vmatpush.msra.mxu0 0.0
        %679 = vmatpush.msra.mxu0 %v662
        %680 = vmatmul.f32.gmra.mxu0 %v419
        %v681 = vpop.f32.mrf.mxu0
        %v682 = vadd.f32 0.0, %v681
        %683 = vdwg.mxu0
        %684 = vmatpush.msra.mxu0 0.0
        %685 = vmatpush.msra.mxu0 0.0
        %686 = vmatpush.msra.mxu0 0.0
        %687 = vmatpush.msra.mxu0 0.0
        %688 = vmatpush.msra.mxu0 0.0
        %689 = vmatpush.msra.mxu0 0.0
        %690 = vmatpush.msra.mxu0 0.0
        %691 = vmatpush.msra.mxu0 0.0
        %692 = vmatpush.msra.mxu0 0.0
        %693 = vmatpush.msra.mxu0 0.0
        %694 = vmatpush.msra.mxu0 0.0
        %695 = vmatpush.msra.mxu0 0.0
        %696 = vmatpush.msra.mxu0 0.0
        %697 = vmatpush.msra.mxu0 0.0
        %698 = vmatpush.msra.mxu0 0.0
        %699 = vmatpush.msra.mxu0 %v662
        %700 = vmatmul.f32.gmra.mxu0 %v442
        %v701 = vpop.f32.mrf.mxu0
        %v702 = vadd.f32 0.0, %v701
        %703 = vdwg.mxu0
        %704 = vmatpush.msra.mxu0 0.0
        %705 = vmatpush.msra.mxu0 0.0
        %706 = vmatpush.msra.mxu0 0.0
        %707 = vmatpush.msra.mxu0 0.0
        %708 = vmatpush.msra.mxu0 0.0
        %709 = vmatpush.msra.mxu0 0.0
        %710 = vmatpush.msra.mxu0 0.0
        %711 = vmatpush.msra.mxu0 0.0
        %712 = vmatpush.msra.mxu0 0.0
        %713 = vmatpush.msra.mxu0 0.0
        %714 = vmatpush.msra.mxu0 0.0
        %715 = vmatpush.msra.mxu0 0.0
        %716 = vmatpush.msra.mxu0 0.0
        %717 = vmatpush.msra.mxu0 0.0
        %718 = vmatpush.msra.mxu0 0.0
        %719 = vmatpush.msra.mxu0 %v662
        %720 = vmatmul.f32.gmra.mxu0 %v465
        %v721 = vpop.f32.mrf.mxu0
        %v722 = vadd.f32 0.0, %v721
        %723 = vdwg.mxu0
        %724 = vmatpush.msra.mxu0 0.0
        %725 = vmatpush.msra.mxu0 0.0
        %726 = vmatpush.msra.mxu0 0.0
        %727 = vmatpush.msra.mxu0 0.0
        %728 = vmatpush.msra.mxu0 0.0
        %729 = vmatpush.msra.mxu0 0.0
        %730 = vmatpush.msra.mxu0 0.0
        %731 = vmatpush.msra.mxu0 0.0
        %732 = vmatpush.msra.mxu0 0.0
        %733 = vmatpush.msra.mxu0 0.0
        %734 = vmatpush.msra.mxu0 0.0
        %735 = vmatpush.msra.mxu0 0.0
        %736 = vmatpush.msra.mxu0 0.0
        %737 = vmatpush.msra.mxu0 0.0
        %738 = vmatpush.msra.mxu0 0.0
        %739 = vmatpush.msra.mxu0 %v662
        %740 = vmatmul.f32.gmra.mxu0 %v488
        %v741 = vpop.f32.mrf.mxu0
        %v742 = vadd.f32 0.0, %v741
        %743 = vdwg.mxu0
        %v745 = vsel %vm417, %v702, 0
        %747 = vmatpush.msra.mxu0 0.0
        %748 = vmatpush.msra.mxu0 0.0
        %749 = vmatpush.msra.mxu0 0.0
        %750 = vmatpush.msra.mxu0 0.0
        %751 = vmatpush.msra.mxu0 0.0
        %752 = vmatpush.msra.mxu0 0.0
        %753 = vmatpush.msra.mxu0 0.0
        %754 = vmatpush.msra.mxu0 0.0
        %755 = vmatpush.msra.mxu0 0.0
        %756 = vmatpush.msra.mxu0 0.0
        %757 = vmatpush.msra.mxu0 0.0
        %758 = vmatpush.msra.mxu0 0.0
        %759 = vmatpush.msra.mxu0 0.0
        %760 = vmatpush.msra.mxu0 0.0
        %761 = vmatpush.msra.mxu0 0.0
        %762 = vmatpush.msra.mxu0 %v370
        %763 = vmatmul.f32.gmra.mxu0 %v745
        %v764 = vpop.f32.mrf.mxu0
        %v765 = vadd.f32 0.0, %v764
        %766 = vdwg.mxu0
        %v768 = vsel %vm417, %v682, 0
        %770 = vmatpush.msra.mxu0 0.0
        %771 = vmatpush.msra.mxu0 0.0
        %772 = vmatpush.msra.mxu0 0.0
        %773 = vmatpush.msra.mxu0 0.0
        %774 = vmatpush.msra.mxu0 0.0
        %775 = vmatpush.msra.mxu0 0.0
        %776 = vmatpush.msra.mxu0 0.0
        %777 = vmatpush.msra.mxu0 0.0
        %778 = vmatpush.msra.mxu0 0.0
        %779 = vmatpush.msra.mxu0 0.0
        %780 = vmatpush.msra.mxu0 0.0
        %781 = vmatpush.msra.mxu0 0.0
        %782 = vmatpush.msra.mxu0 0.0
        %783 = vmatpush.msra.mxu0 0.0
        %784 = vmatpush.msra.mxu0 0.0
        %785 = vmatpush.msra.mxu0 %v369
        %786 = vmatmul.f32.gmra.mxu0 %v768
        %v787 = vpop.f32.mrf.mxu0
        %v788 = vadd.f32 %v765, %v787
        %789 = vdwg.mxu0
        %v790 = vadd.f32 %v788, %v559
        %v792 = vsel %vm417, %v742, 0
        %794 = vmatpush.msra.mxu0 0.0
        %795 = vmatpush.msra.mxu0 0.0
        %796 = vmatpush.msra.mxu0 0.0
        %797 = vmatpush.msra.mxu0 0.0
        %798 = vmatpush.msra.mxu0 0.0
        %799 = vmatpush.msra.mxu0 0.0
        %800 = vmatpush.msra.mxu0 0.0
        %801 = vmatpush.msra.mxu0 0.0
        %802 = vmatpush.msra.mxu0 0.0
        %803 = vmatpush.msra.mxu0 0.0
        %804 = vmatpush.msra.mxu0 0.0
        %805 = vmatpush.msra.mxu0 0.0
        %806 = vmatpush.msra.mxu0 0.0
        %807 = vmatpush.msra.mxu0 0.0
        %808 = vmatpush.msra.mxu0 0.0
        %809 = vmatpush.msra.mxu0 %v370
        %810 = vmatmul.f32.gmra.mxu0 %v792
        %v811 = vpop.f32.mrf.mxu0
        %v812 = vadd.f32 0.0, %v811
        %813 = vdwg.mxu0
        %v815 = vsel %vm417, %v722, 0
        %817 = vmatpush.msra.mxu0 0.0
        %818 = vmatpush.msra.mxu0 0.0
        %819 = vmatpush.msra.mxu0 0.0
        %820 = vmatpush.msra.mxu0 0.0
        %821 = vmatpush.msra.mxu0 0.0
        %822 = vmatpush.msra.mxu0 0.0
        %823 = vmatpush.msra.mxu0 0.0
        %824 = vmatpush.msra.mxu0 0.0
        %825 = vmatpush.msra.mxu0 0.0
        %826 = vmatpush.msra.mxu0 0.0
        %827 = vmatpush.msra.mxu0 0.0
        %828 = vmatpush.msra.mxu0 0.0
        %829 = vmatpush.msra.mxu0 0.0
        %830 = vmatpush.msra.mxu0 0.0
        %831 = vmatpush.msra.mxu0 0.0
        %832 = vmatpush.msra.mxu0 %v369
        %833 = vmatmul.f32.gmra.mxu0 %v815
        %v834 = vpop.f32.mrf.mxu0
        %v835 = vadd.f32 %v812, %v834
        %836 = vdwg.mxu0
        %v837 = vadd.f32 %v835, %v559
        %v839 = vrot.slane %v790, 1
        %v840 = vrot.slane %v790, 2
        %v841 = vrot.slane %v790, 3
        %845 = vst.msk [vmem:[%s616 + $0x2] sm:$0x1] %vm617, %v790
        %846 = vst.msk [vmem:[%s616 + $0x12] sm:$0x1] %vm617, %v839
        %847 = vst.msk [vmem:[%s616 + $0x22] sm:$0x1] %vm617, %v840
        %848 = vst.msk [vmem:[%s616 + $0x32] sm:$0x1] %vm617, %v841
        %v850 = vrot.slane %v837, 1
        %v851 = vrot.slane %v837, 2
        %v852 = vrot.slane %v837, 3
        %856 = vst.msk [vmem:[%s616 + $0x3] sm:$0x1] %vm617, %v837
        %857 = vst.msk [vmem:[%s616 + $0x13] sm:$0x1] %vm617, %v850
        %858 = vst.msk [vmem:[%s616 + $0x23] sm:$0x1] %vm617, %v851
        %859 = vst.msk [vmem:[%s616 + $0x33] sm:$0x1] %vm617, %v852
        %v860 = vld [vmem:[%s305 + $0x2] sm:$0x1]
        %v861 = vld [vmem:[%s305 + $0xa] sm:$0x1]
        %v862 = vld [vmem:[%s305 + $0x12] sm:$0x1]
        %v863 = vld [vmem:[%s305 + $0x1a] sm:$0x1]
        %v864 = vld [vmem:[%s305 + $0x22] sm:$0x1]
        %v865 = vld [vmem:[%s305 + $0x2a] sm:$0x1]
        %v866 = vld [vmem:[%s305 + $0x32] sm:$0x1]
        %v867 = vld [vmem:[%s305 + $0x3a] sm:$0x1]
        %v876 = vrot.slane %v861, 7
        %v877 = vsel %vm396, %v876, %v860
        %v878 = vrot.slane %v862, 6
        %v879 = vsel %vm399, %v878, %v877
        %v880 = vrot.slane %v863, 5
        %v881 = vsel %vm402, %v880, %v879
        %v882 = vrot.slane %v864, 4
        %v883 = vsel %vm405, %v882, %v881
        %v884 = vrot.slane %v865, 3
        %v885 = vsel %vm408, %v884, %v883
        %v886 = vrot.slane %v866, 2
        %v887 = vsel %vm411, %v886, %v885
        %v888 = vrot.slane %v867, 1
        %v889 = vsel %vm414, %v888, %v887
        %891 = vmatpush.msra.mxu0 0.0
        %892 = vmatpush.msra.mxu0 0.0
        %893 = vmatpush.msra.mxu0 0.0
        %894 = vmatpush.msra.mxu0 0.0
        %895 = vmatpush.msra.mxu0 0.0
        %896 = vmatpush.msra.mxu0 0.0
        %897 = vmatpush.msra.mxu0 0.0
        %898 = vmatpush.msra.mxu0 0.0
        %899 = vmatpush.msra.mxu0 0.0
        %900 = vmatpush.msra.mxu0 0.0
        %901 = vmatpush.msra.mxu0 0.0
        %902 = vmatpush.msra.mxu0 0.0
        %903 = vmatpush.msra.mxu0 0.0
        %904 = vmatpush.msra.mxu0 0.0
        %905 = vmatpush.msra.mxu0 0.0
        %906 = vmatpush.msra.mxu0 %v889
        %907 = vmatmul.f32.gmra.mxu0 %v419
        %v908 = vpop.f32.mrf.mxu0
        %v909 = vadd.f32 0.0, %v908
        %910 = vdwg.mxu0
        %911 = vmatpush.msra.mxu0 0.0
        %912 = vmatpush.msra.mxu0 0.0
        %913 = vmatpush.msra.mxu0 0.0
        %914 = vmatpush.msra.mxu0 0.0
        %915 = vmatpush.msra.mxu0 0.0
        %916 = vmatpush.msra.mxu0 0.0
        %917 = vmatpush.msra.mxu0 0.0
        %918 = vmatpush.msra.mxu0 0.0
        %919 = vmatpush.msra.mxu0 0.0
        %920 = vmatpush.msra.mxu0 0.0
        %921 = vmatpush.msra.mxu0 0.0
        %922 = vmatpush.msra.mxu0 0.0
        %923 = vmatpush.msra.mxu0 0.0
        %924 = vmatpush.msra.mxu0 0.0
        %925 = vmatpush.msra.mxu0 0.0
        %926 = vmatpush.msra.mxu0 %v889
        %927 = vmatmul.f32.gmra.mxu0 %v442
        %v928 = vpop.f32.mrf.mxu0
        %v929 = vadd.f32 0.0, %v928
        %930 = vdwg.mxu0
        %931 = vmatpush.msra.mxu0 0.0
        %932 = vmatpush.msra.mxu0 0.0
        %933 = vmatpush.msra.mxu0 0.0
        %934 = vmatpush.msra.mxu0 0.0
        %935 = vmatpush.msra.mxu0 0.0
        %936 = vmatpush.msra.mxu0 0.0
        %937 = vmatpush.msra.mxu0 0.0
        %938 = vmatpush.msra.mxu0 0.0
        %939 = vmatpush.msra.mxu0 0.0
        %940 = vmatpush.msra.mxu0 0.0
        %941 = vmatpush.msra.mxu0 0.0
        %942 = vmatpush.msra.mxu0 0.0
        %943 = vmatpush.msra.mxu0 0.0
        %944 = vmatpush.msra.mxu0 0.0
        %945 = vmatpush.msra.mxu0 0.0
        %946 = vmatpush.msra.mxu0 %v889
        %947 = vmatmul.f32.gmra.mxu0 %v465
        %v948 = vpop.f32.mrf.mxu0
        %v949 = vadd.f32 0.0, %v948
        %950 = vdwg.mxu0
        %951 = vmatpush.msra.mxu0 0.0
        %952 = vmatpush.msra.mxu0 0.0
        %953 = vmatpush.msra.mxu0 0.0
        %954 = vmatpush.msra.mxu0 0.0
        %955 = vmatpush.msra.mxu0 0.0
        %956 = vmatpush.msra.mxu0 0.0
        %957 = vmatpush.msra.mxu0 0.0
        %958 = vmatpush.msra.mxu0 0.0
        %959 = vmatpush.msra.mxu0 0.0
        %960 = vmatpush.msra.mxu0 0.0
        %961 = vmatpush.msra.mxu0 0.0
        %962 = vmatpush.msra.mxu0 0.0
        %963 = vmatpush.msra.mxu0 0.0
        %964 = vmatpush.msra.mxu0 0.0
        %965 = vmatpush.msra.mxu0 0.0
        %966 = vmatpush.msra.mxu0 %v889
        %967 = vmatmul.f32.gmra.mxu0 %v488
        %v968 = vpop.f32.mrf.mxu0
        %v969 = vadd.f32 0.0, %v968
        %970 = vdwg.mxu0
        %v972 = vsel %vm417, %v929, 0
        %974 = vmatpush.msra.mxu0 0.0
        %975 = vmatpush.msra.mxu0 0.0
        %976 = vmatpush.msra.mxu0 0.0
        %977 = vmatpush.msra.mxu0 0.0
        %978 = vmatpush.msra.mxu0 0.0
        %979 = vmatpush.msra.mxu0 0.0
        %980 = vmatpush.msra.mxu0 0.0
        %981 = vmatpush.msra.mxu0 0.0
        %982 = vmatpush.msra.mxu0 0.0
        %983 = vmatpush.msra.mxu0 0.0
        %984 = vmatpush.msra.mxu0 0.0
        %985 = vmatpush.msra.mxu0 0.0
        %986 = vmatpush.msra.mxu0 0.0
        %987 = vmatpush.msra.mxu0 0.0
        %988 = vmatpush.msra.mxu0 0.0
        %989 = vmatpush.msra.mxu0 %v370
        %990 = vmatmul.f32.gmra.mxu0 %v972
        %v991 = vpop.f32.mrf.mxu0
        %v992 = vadd.f32 0.0, %v991
        %993 = vdwg.mxu0
        %v995 = vsel %vm417, %v909, 0
        %997 = vmatpush.msra.mxu0 0.0
        %998 = vmatpush.msra.mxu0 0.0
        %999 = vmatpush.msra.mxu0 0.0
        %1000 = vmatpush.msra.mxu0 0.0
        %1001 = vmatpush.msra.mxu0 0.0
        %1002 = vmatpush.msra.mxu0 0.0
        %1003 = vmatpush.msra.mxu0 0.0
        %1004 = vmatpush.msra.mxu0 0.0
        %1005 = vmatpush.msra.mxu0 0.0
        %1006 = vmatpush.msra.mxu0 0.0
        %1007 = vmatpush.msra.mxu0 0.0
        %1008 = vmatpush.msra.mxu0 0.0
        %1009 = vmatpush.msra.mxu0 0.0
        %1010 = vmatpush.msra.mxu0 0.0
        %1011 = vmatpush.msra.mxu0 0.0
        %1012 = vmatpush.msra.mxu0 %v369
        %1013 = vmatmul.f32.gmra.mxu0 %v995
        %v1014 = vpop.f32.mrf.mxu0
        %v1015 = vadd.f32 %v992, %v1014
        %1016 = vdwg.mxu0
        %v1017 = vadd.f32 %v1015, %v559
        %v1019 = vsel %vm417, %v969, 0
        %1021 = vmatpush.msra.mxu0 0.0
        %1022 = vmatpush.msra.mxu0 0.0
        %1023 = vmatpush.msra.mxu0 0.0
        %1024 = vmatpush.msra.mxu0 0.0
        %1025 = vmatpush.msra.mxu0 0.0
        %1026 = vmatpush.msra.mxu0 0.0
        %1027 = vmatpush.msra.mxu0 0.0
        %1028 = vmatpush.msra.mxu0 0.0
        %1029 = vmatpush.msra.mxu0 0.0
        %1030 = vmatpush.msra.mxu0 0.0
        %1031 = vmatpush.msra.mxu0 0.0
        %1032 = vmatpush.msra.mxu0 0.0
        %1033 = vmatpush.msra.mxu0 0.0
        %1034 = vmatpush.msra.mxu0 0.0
        %1035 = vmatpush.msra.mxu0 0.0
        %1036 = vmatpush.msra.mxu0 %v370
        %1037 = vmatmul.f32.gmra.mxu0 %v1019
        %v1038 = vpop.f32.mrf.mxu0
        %v1039 = vadd.f32 0.0, %v1038
        %1040 = vdwg.mxu0
        %v1042 = vsel %vm417, %v949, 0
        %1044 = vmatpush.msra.mxu0 0.0
        %1045 = vmatpush.msra.mxu0 0.0
        %1046 = vmatpush.msra.mxu0 0.0
        %1047 = vmatpush.msra.mxu0 0.0
        %1048 = vmatpush.msra.mxu0 0.0
        %1049 = vmatpush.msra.mxu0 0.0
        %1050 = vmatpush.msra.mxu0 0.0
        %1051 = vmatpush.msra.mxu0 0.0
        %1052 = vmatpush.msra.mxu0 0.0
        %1053 = vmatpush.msra.mxu0 0.0
        %1054 = vmatpush.msra.mxu0 0.0
        %1055 = vmatpush.msra.mxu0 0.0
        %1056 = vmatpush.msra.mxu0 0.0
        %1057 = vmatpush.msra.mxu0 0.0
        %1058 = vmatpush.msra.mxu0 0.0
        %1059 = vmatpush.msra.mxu0 %v369
        %1060 = vmatmul.f32.gmra.mxu0 %v1042
        %v1061 = vpop.f32.mrf.mxu0
        %v1062 = vadd.f32 %v1039, %v1061
        %1063 = vdwg.mxu0
        %v1064 = vadd.f32 %v1062, %v559
        %v1066 = vrot.slane %v1017, 1
        %v1067 = vrot.slane %v1017, 2
        %v1068 = vrot.slane %v1017, 3
        %1072 = vst.msk [vmem:[%s616 + $0x4] sm:$0x1] %vm617, %v1017
        %1073 = vst.msk [vmem:[%s616 + $0x14] sm:$0x1] %vm617, %v1066
        %1074 = vst.msk [vmem:[%s616 + $0x24] sm:$0x1] %vm617, %v1067
        %1075 = vst.msk [vmem:[%s616 + $0x34] sm:$0x1] %vm617, %v1068
        %v1077 = vrot.slane %v1064, 1
        %v1078 = vrot.slane %v1064, 2
        %v1079 = vrot.slane %v1064, 3
        %1083 = vst.msk [vmem:[%s616 + $0x5] sm:$0x1] %vm617, %v1064
        %1084 = vst.msk [vmem:[%s616 + $0x15] sm:$0x1] %vm617, %v1077
        %1085 = vst.msk [vmem:[%s616 + $0x25] sm:$0x1] %vm617, %v1078
        %1086 = vst.msk [vmem:[%s616 + $0x35] sm:$0x1] %vm617, %v1079
        %v1087 = vld [vmem:[%s305 + $0x3] sm:$0x1]
        %v1088 = vld [vmem:[%s305 + $0xb] sm:$0x1]
        %v1089 = vld [vmem:[%s305 + $0x13] sm:$0x1]
        %v1090 = vld [vmem:[%s305 + $0x1b] sm:$0x1]
        %v1091 = vld [vmem:[%s305 + $0x23] sm:$0x1]
        %v1092 = vld [vmem:[%s305 + $0x2b] sm:$0x1]
        %v1093 = vld [vmem:[%s305 + $0x33] sm:$0x1]
        %v1094 = vld [vmem:[%s305 + $0x3b] sm:$0x1]
        %v1103 = vrot.slane %v1088, 7
        %v1104 = vsel %vm396, %v1103, %v1087
        %v1105 = vrot.slane %v1089, 6
        %v1106 = vsel %vm399, %v1105, %v1104
        %v1107 = vrot.slane %v1090, 5
        %v1108 = vsel %vm402, %v1107, %v1106
        %v1109 = vrot.slane %v1091, 4
        %v1110 = vsel %vm405, %v1109, %v1108
        %v1111 = vrot.slane %v1092, 3
        %v1112 = vsel %vm408, %v1111, %v1110
        %v1113 = vrot.slane %v1093, 2
        %v1114 = vsel %vm411, %v1113, %v1112
        %v1115 = vrot.slane %v1094, 1
        %v1116 = vsel %vm414, %v1115, %v1114
        %1118 = vmatpush.msra.mxu0 0.0
        %1119 = vmatpush.msra.mxu0 0.0
        %1120 = vmatpush.msra.mxu0 0.0
        %1121 = vmatpush.msra.mxu0 0.0
        %1122 = vmatpush.msra.mxu0 0.0
        %1123 = vmatpush.msra.mxu0 0.0
        %1124 = vmatpush.msra.mxu0 0.0
        %1125 = vmatpush.msra.mxu0 0.0
        %1126 = vmatpush.msra.mxu0 0.0
        %1127 = vmatpush.msra.mxu0 0.0
        %1128 = vmatpush.msra.mxu0 0.0
        %1129 = vmatpush.msra.mxu0 0.0
        %1130 = vmatpush.msra.mxu0 0.0
        %1131 = vmatpush.msra.mxu0 0.0
        %1132 = vmatpush.msra.mxu0 0.0
        %1133 = vmatpush.msra.mxu0 %v1116
        %1134 = vmatmul.f32.gmra.mxu0 %v419
        %v1135 = vpop.f32.mrf.mxu0
        %v1136 = vadd.f32 0.0, %v1135
        %1137 = vdwg.mxu0
        %1138 = vmatpush.msra.mxu0 0.0
        %1139 = vmatpush.msra.mxu0 0.0
        %1140 = vmatpush.msra.mxu0 0.0
        %1141 = vmatpush.msra.mxu0 0.0
        %1142 = vmatpush.msra.mxu0 0.0
        %1143 = vmatpush.msra.mxu0 0.0
        %1144 = vmatpush.msra.mxu0 0.0
        %1145 = vmatpush.msra.mxu0 0.0
        %1146 = vmatpush.msra.mxu0 0.0
        %1147 = vmatpush.msra.mxu0 0.0
        %1148 = vmatpush.msra.mxu0 0.0
        %1149 = vmatpush.msra.mxu0 0.0
        %1150 = vmatpush.msra.mxu0 0.0
        %1151 = vmatpush.msra.mxu0 0.0
        %1152 = vmatpush.msra.mxu0 0.0
        %1153 = vmatpush.msra.mxu0 %v1116
        %1154 = vmatmul.f32.gmra.mxu0 %v442
        %v1155 = vpop.f32.mrf.mxu0
        %v1156 = vadd.f32 0.0, %v1155
        %1157 = vdwg.mxu0
        %1158 = vmatpush.msra.mxu0 0.0
        %1159 = vmatpush.msra.mxu0 0.0
        %1160 = vmatpush.msra.mxu0 0.0
        %1161 = vmatpush.msra.mxu0 0.0
        %1162 = vmatpush.msra.mxu0 0.0
        %1163 = vmatpush.msra.mxu0 0.0
        %1164 = vmatpush.msra.mxu0 0.0
        %1165 = vmatpush.msra.mxu0 0.0
        %1166 = vmatpush.msra.mxu0 0.0
        %1167 = vmatpush.msra.mxu0 0.0
        %1168 = vmatpush.msra.mxu0 0.0
        %1169 = vmatpush.msra.mxu0 0.0
        %1170 = vmatpush.msra.mxu0 0.0
        %1171 = vmatpush.msra.mxu0 0.0
        %1172 = vmatpush.msra.mxu0 0.0
        %1173 = vmatpush.msra.mxu0 %v1116
        %1174 = vmatmul.f32.gmra.mxu0 %v465
        %v1175 = vpop.f32.mrf.mxu0
        %v1176 = vadd.f32 0.0, %v1175
        %1177 = vdwg.mxu0
        %1178 = vmatpush.msra.mxu0 0.0
        %1179 = vmatpush.msra.mxu0 0.0
        %1180 = vmatpush.msra.mxu0 0.0
        %1181 = vmatpush.msra.mxu0 0.0
        %1182 = vmatpush.msra.mxu0 0.0
        %1183 = vmatpush.msra.mxu0 0.0
        %1184 = vmatpush.msra.mxu0 0.0
        %1185 = vmatpush.msra.mxu0 0.0
        %1186 = vmatpush.msra.mxu0 0.0
        %1187 = vmatpush.msra.mxu0 0.0
        %1188 = vmatpush.msra.mxu0 0.0
        %1189 = vmatpush.msra.mxu0 0.0
        %1190 = vmatpush.msra.mxu0 0.0
        %1191 = vmatpush.msra.mxu0 0.0
        %1192 = vmatpush.msra.mxu0 0.0
        %1193 = vmatpush.msra.mxu0 %v1116
        %1194 = vmatmul.f32.gmra.mxu0 %v488
        %v1195 = vpop.f32.mrf.mxu0
        %v1196 = vadd.f32 0.0, %v1195
        %1197 = vdwg.mxu0
        %v1199 = vsel %vm417, %v1156, 0
        %1201 = vmatpush.msra.mxu0 0.0
        %1202 = vmatpush.msra.mxu0 0.0
        %1203 = vmatpush.msra.mxu0 0.0
        %1204 = vmatpush.msra.mxu0 0.0
        %1205 = vmatpush.msra.mxu0 0.0
        %1206 = vmatpush.msra.mxu0 0.0
        %1207 = vmatpush.msra.mxu0 0.0
        %1208 = vmatpush.msra.mxu0 0.0
        %1209 = vmatpush.msra.mxu0 0.0
        %1210 = vmatpush.msra.mxu0 0.0
        %1211 = vmatpush.msra.mxu0 0.0
        %1212 = vmatpush.msra.mxu0 0.0
        %1213 = vmatpush.msra.mxu0 0.0
        %1214 = vmatpush.msra.mxu0 0.0
        %1215 = vmatpush.msra.mxu0 0.0
        %1216 = vmatpush.msra.mxu0 %v370
        %1217 = vmatmul.f32.gmra.mxu0 %v1199
        %v1218 = vpop.f32.mrf.mxu0
        %v1219 = vadd.f32 0.0, %v1218
        %1220 = vdwg.mxu0
        %v1222 = vsel %vm417, %v1136, 0
        %1224 = vmatpush.msra.mxu0 0.0
        %1225 = vmatpush.msra.mxu0 0.0
        %1226 = vmatpush.msra.mxu0 0.0
        %1227 = vmatpush.msra.mxu0 0.0
        %1228 = vmatpush.msra.mxu0 0.0
        %1229 = vmatpush.msra.mxu0 0.0
        %1230 = vmatpush.msra.mxu0 0.0
        %1231 = vmatpush.msra.mxu0 0.0
        %1232 = vmatpush.msra.mxu0 0.0
        %1233 = vmatpush.msra.mxu0 0.0
        %1234 = vmatpush.msra.mxu0 0.0
        %1235 = vmatpush.msra.mxu0 0.0
        %1236 = vmatpush.msra.mxu0 0.0
        %1237 = vmatpush.msra.mxu0 0.0
        %1238 = vmatpush.msra.mxu0 0.0
        %1239 = vmatpush.msra.mxu0 %v369
        %1240 = vmatmul.f32.gmra.mxu0 %v1222
        %v1241 = vpop.f32.mrf.mxu0
        %v1242 = vadd.f32 %v1219, %v1241
        %1243 = vdwg.mxu0
        %v1244 = vadd.f32 %v1242, %v559
        %v1246 = vsel %vm417, %v1196, 0
        %1248 = vmatpush.msra.mxu0 0.0
        %1249 = vmatpush.msra.mxu0 0.0
        %1250 = vmatpush.msra.mxu0 0.0
        %1251 = vmatpush.msra.mxu0 0.0
        %1252 = vmatpush.msra.mxu0 0.0
        %1253 = vmatpush.msra.mxu0 0.0
        %1254 = vmatpush.msra.mxu0 0.0
        %1255 = vmatpush.msra.mxu0 0.0
        %1256 = vmatpush.msra.mxu0 0.0
        %1257 = vmatpush.msra.mxu0 0.0
        %1258 = vmatpush.msra.mxu0 0.0
        %1259 = vmatpush.msra.mxu0 0.0
        %1260 = vmatpush.msra.mxu0 0.0
        %1261 = vmatpush.msra.mxu0 0.0
        %1262 = vmatpush.msra.mxu0 0.0
        %1263 = vmatpush.msra.mxu0 %v370
        %1264 = vmatmul.f32.gmra.mxu0 %v1246
        %v1265 = vpop.f32.mrf.mxu0
        %v1266 = vadd.f32 0.0, %v1265
        %1267 = vdwg.mxu0
        %v1269 = vsel %vm417, %v1176, 0
        %1271 = vmatpush.msra.mxu0 0.0
        %1272 = vmatpush.msra.mxu0 0.0
        %1273 = vmatpush.msra.mxu0 0.0
        %1274 = vmatpush.msra.mxu0 0.0
        %1275 = vmatpush.msra.mxu0 0.0
        %1276 = vmatpush.msra.mxu0 0.0
        %1277 = vmatpush.msra.mxu0 0.0
        %1278 = vmatpush.msra.mxu0 0.0
        %1279 = vmatpush.msra.mxu0 0.0
        %1280 = vmatpush.msra.mxu0 0.0
        %1281 = vmatpush.msra.mxu0 0.0
        %1282 = vmatpush.msra.mxu0 0.0
        %1283 = vmatpush.msra.mxu0 0.0
        %1284 = vmatpush.msra.mxu0 0.0
        %1285 = vmatpush.msra.mxu0 0.0
        %1286 = vmatpush.msra.mxu0 %v369
        %1287 = vmatmul.f32.gmra.mxu0 %v1269
        %v1288 = vpop.f32.mrf.mxu0
        %v1289 = vadd.f32 %v1266, %v1288
        %1290 = vdwg.mxu0
        %v1291 = vadd.f32 %v1289, %v559
        %v1293 = vrot.slane %v1244, 1
        %v1294 = vrot.slane %v1244, 2
        %v1295 = vrot.slane %v1244, 3
        %1299 = vst.msk [vmem:[%s616 + $0x6] sm:$0x1] %vm617, %v1244
        %1300 = vst.msk [vmem:[%s616 + $0x16] sm:$0x1] %vm617, %v1293
        %1301 = vst.msk [vmem:[%s616 + $0x26] sm:$0x1] %vm617, %v1294
        %1302 = vst.msk [vmem:[%s616 + $0x36] sm:$0x1] %vm617, %v1295
        %v1304 = vrot.slane %v1291, 1
        %v1305 = vrot.slane %v1291, 2
        %v1306 = vrot.slane %v1291, 3
        %1310 = vst.msk [vmem:[%s616 + $0x7] sm:$0x1] %vm617, %v1291
        %1311 = vst.msk [vmem:[%s616 + $0x17] sm:$0x1] %vm617, %v1304
        %1312 = vst.msk [vmem:[%s616 + $0x27] sm:$0x1] %vm617, %v1305
        %1313 = vst.msk [vmem:[%s616 + $0x37] sm:$0x1] %vm617, %v1306
        %v1314 = vld [vmem:[%s305 + $0x4] sm:$0x1]
        %v1315 = vld [vmem:[%s305 + $0xc] sm:$0x1]
        %v1316 = vld [vmem:[%s305 + $0x14] sm:$0x1]
        %v1317 = vld [vmem:[%s305 + $0x1c] sm:$0x1]
        %v1318 = vld [vmem:[%s305 + $0x24] sm:$0x1]
        %v1319 = vld [vmem:[%s305 + $0x2c] sm:$0x1]
        %v1320 = vld [vmem:[%s305 + $0x34] sm:$0x1]
        %v1321 = vld [vmem:[%s305 + $0x3c] sm:$0x1]
        %v1330 = vrot.slane %v1315, 7
        %v1331 = vsel %vm396, %v1330, %v1314
        %v1332 = vrot.slane %v1316, 6
        %v1333 = vsel %vm399, %v1332, %v1331
        %v1334 = vrot.slane %v1317, 5
        %v1335 = vsel %vm402, %v1334, %v1333
        %v1336 = vrot.slane %v1318, 4
        %v1337 = vsel %vm405, %v1336, %v1335
        %v1338 = vrot.slane %v1319, 3
        %v1339 = vsel %vm408, %v1338, %v1337
        %v1340 = vrot.slane %v1320, 2
        %v1341 = vsel %vm411, %v1340, %v1339
        %v1342 = vrot.slane %v1321, 1
        %v1343 = vsel %vm414, %v1342, %v1341
        %1345 = vmatpush.msra.mxu0 0.0
        %1346 = vmatpush.msra.mxu0 0.0
        %1347 = vmatpush.msra.mxu0 0.0
        %1348 = vmatpush.msra.mxu0 0.0
        %1349 = vmatpush.msra.mxu0 0.0
        %1350 = vmatpush.msra.mxu0 0.0
        %1351 = vmatpush.msra.mxu0 0.0
        %1352 = vmatpush.msra.mxu0 0.0
        %1353 = vmatpush.msra.mxu0 0.0
        %1354 = vmatpush.msra.mxu0 0.0
        %1355 = vmatpush.msra.mxu0 0.0
        %1356 = vmatpush.msra.mxu0 0.0
        %1357 = vmatpush.msra.mxu0 0.0
        %1358 = vmatpush.msra.mxu0 0.0
        %1359 = vmatpush.msra.mxu0 0.0
        %1360 = vmatpush.msra.mxu0 %v1343
        %1361 = vmatmul.f32.gmra.mxu0 %v419
        %v1362 = vpop.f32.mrf.mxu0
        %v1363 = vadd.f32 0.0, %v1362
        %1364 = vdwg.mxu0
        %1365 = vmatpush.msra.mxu0 0.0
        %1366 = vmatpush.msra.mxu0 0.0
        %1367 = vmatpush.msra.mxu0 0.0
        %1368 = vmatpush.msra.mxu0 0.0
        %1369 = vmatpush.msra.mxu0 0.0
        %1370 = vmatpush.msra.mxu0 0.0
        %1371 = vmatpush.msra.mxu0 0.0
        %1372 = vmatpush.msra.mxu0 0.0
        %1373 = vmatpush.msra.mxu0 0.0
        %1374 = vmatpush.msra.mxu0 0.0
        %1375 = vmatpush.msra.mxu0 0.0
        %1376 = vmatpush.msra.mxu0 0.0
        %1377 = vmatpush.msra.mxu0 0.0
        %1378 = vmatpush.msra.mxu0 0.0
        %1379 = vmatpush.msra.mxu0 0.0
        %1380 = vmatpush.msra.mxu0 %v1343
        %1381 = vmatmul.f32.gmra.mxu0 %v442
        %v1382 = vpop.f32.mrf.mxu0
        %v1383 = vadd.f32 0.0, %v1382
        %1384 = vdwg.mxu0
        %1385 = vmatpush.msra.mxu0 0.0
        %1386 = vmatpush.msra.mxu0 0.0
        %1387 = vmatpush.msra.mxu0 0.0
        %1388 = vmatpush.msra.mxu0 0.0
        %1389 = vmatpush.msra.mxu0 0.0
        %1390 = vmatpush.msra.mxu0 0.0
        %1391 = vmatpush.msra.mxu0 0.0
        %1392 = vmatpush.msra.mxu0 0.0
        %1393 = vmatpush.msra.mxu0 0.0
        %1394 = vmatpush.msra.mxu0 0.0
        %1395 = vmatpush.msra.mxu0 0.0
        %1396 = vmatpush.msra.mxu0 0.0
        %1397 = vmatpush.msra.mxu0 0.0
        %1398 = vmatpush.msra.mxu0 0.0
        %1399 = vmatpush.msra.mxu0 0.0
        %1400 = vmatpush.msra.mxu0 %v1343
        %1401 = vmatmul.f32.gmra.mxu0 %v465
        %v1402 = vpop.f32.mrf.mxu0
        %v1403 = vadd.f32 0.0, %v1402
        %1404 = vdwg.mxu0
        %1405 = vmatpush.msra.mxu0 0.0
        %1406 = vmatpush.msra.mxu0 0.0
        %1407 = vmatpush.msra.mxu0 0.0
        %1408 = vmatpush.msra.mxu0 0.0
        %1409 = vmatpush.msra.mxu0 0.0
        %1410 = vmatpush.msra.mxu0 0.0
        %1411 = vmatpush.msra.mxu0 0.0
        %1412 = vmatpush.msra.mxu0 0.0
        %1413 = vmatpush.msra.mxu0 0.0
        %1414 = vmatpush.msra.mxu0 0.0
        %1415 = vmatpush.msra.mxu0 0.0
        %1416 = vmatpush.msra.mxu0 0.0
        %1417 = vmatpush.msra.mxu0 0.0
        %1418 = vmatpush.msra.mxu0 0.0
        %1419 = vmatpush.msra.mxu0 0.0
        %1420 = vmatpush.msra.mxu0 %v1343
        %1421 = vmatmul.f32.gmra.mxu0 %v488
        %v1422 = vpop.f32.mrf.mxu0
        %v1423 = vadd.f32 0.0, %v1422
        %1424 = vdwg.mxu0
        %v1426 = vsel %vm417, %v1383, 0
        %1428 = vmatpush.msra.mxu0 0.0
        %1429 = vmatpush.msra.mxu0 0.0
        %1430 = vmatpush.msra.mxu0 0.0
        %1431 = vmatpush.msra.mxu0 0.0
        %1432 = vmatpush.msra.mxu0 0.0
        %1433 = vmatpush.msra.mxu0 0.0
        %1434 = vmatpush.msra.mxu0 0.0
        %1435 = vmatpush.msra.mxu0 0.0
        %1436 = vmatpush.msra.mxu0 0.0
        %1437 = vmatpush.msra.mxu0 0.0
        %1438 = vmatpush.msra.mxu0 0.0
        %1439 = vmatpush.msra.mxu0 0.0
        %1440 = vmatpush.msra.mxu0 0.0
        %1441 = vmatpush.msra.mxu0 0.0
        %1442 = vmatpush.msra.mxu0 0.0
        %1443 = vmatpush.msra.mxu0 %v370
        %1444 = vmatmul.f32.gmra.mxu0 %v1426
        %v1445 = vpop.f32.mrf.mxu0
        %v1446 = vadd.f32 0.0, %v1445
        %1447 = vdwg.mxu0
        %v1449 = vsel %vm417, %v1363, 0
        %1451 = vmatpush.msra.mxu0 0.0
        %1452 = vmatpush.msra.mxu0 0.0
        %1453 = vmatpush.msra.mxu0 0.0
        %1454 = vmatpush.msra.mxu0 0.0
        %1455 = vmatpush.msra.mxu0 0.0
        %1456 = vmatpush.msra.mxu0 0.0
        %1457 = vmatpush.msra.mxu0 0.0
        %1458 = vmatpush.msra.mxu0 0.0
        %1459 = vmatpush.msra.mxu0 0.0
        %1460 = vmatpush.msra.mxu0 0.0
        %1461 = vmatpush.msra.mxu0 0.0
        %1462 = vmatpush.msra.mxu0 0.0
        %1463 = vmatpush.msra.mxu0 0.0
        %1464 = vmatpush.msra.mxu0 0.0
        %1465 = vmatpush.msra.mxu0 0.0
        %1466 = vmatpush.msra.mxu0 %v369
        %1467 = vmatmul.f32.gmra.mxu0 %v1449
        %v1468 = vpop.f32.mrf.mxu0
        %v1469 = vadd.f32 %v1446, %v1468
        %1470 = vdwg.mxu0
        %v1471 = vadd.f32 %v1469, %v559
        %v1473 = vsel %vm417, %v1423, 0
        %1475 = vmatpush.msra.mxu0 0.0
        %1476 = vmatpush.msra.mxu0 0.0
        %1477 = vmatpush.msra.mxu0 0.0
        %1478 = vmatpush.msra.mxu0 0.0
        %1479 = vmatpush.msra.mxu0 0.0
        %1480 = vmatpush.msra.mxu0 0.0
        %1481 = vmatpush.msra.mxu0 0.0
        %1482 = vmatpush.msra.mxu0 0.0
        %1483 = vmatpush.msra.mxu0 0.0
        %1484 = vmatpush.msra.mxu0 0.0
        %1485 = vmatpush.msra.mxu0 0.0
        %1486 = vmatpush.msra.mxu0 0.0
        %1487 = vmatpush.msra.mxu0 0.0
        %1488 = vmatpush.msra.mxu0 0.0
        %1489 = vmatpush.msra.mxu0 0.0
        %1490 = vmatpush.msra.mxu0 %v370
        %1491 = vmatmul.f32.gmra.mxu0 %v1473
        %v1492 = vpop.f32.mrf.mxu0
        %v1493 = vadd.f32 0.0, %v1492
        %1494 = vdwg.mxu0
        %v1496 = vsel %vm417, %v1403, 0
        %1498 = vmatpush.msra.mxu0 0.0
        %1499 = vmatpush.msra.mxu0 0.0
        %1500 = vmatpush.msra.mxu0 0.0
        %1501 = vmatpush.msra.mxu0 0.0
        %1502 = vmatpush.msra.mxu0 0.0
        %1503 = vmatpush.msra.mxu0 0.0
        %1504 = vmatpush.msra.mxu0 0.0
        %1505 = vmatpush.msra.mxu0 0.0
        %1506 = vmatpush.msra.mxu0 0.0
        %1507 = vmatpush.msra.mxu0 0.0
        %1508 = vmatpush.msra.mxu0 0.0
        %1509 = vmatpush.msra.mxu0 0.0
        %1510 = vmatpush.msra.mxu0 0.0
        %1511 = vmatpush.msra.mxu0 0.0
        %1512 = vmatpush.msra.mxu0 0.0
        %1513 = vmatpush.msra.mxu0 %v369
        %1514 = vmatmul.f32.gmra.mxu0 %v1496
        %v1515 = vpop.f32.mrf.mxu0
        %v1516 = vadd.f32 %v1493, %v1515
        %1517 = vdwg.mxu0
        %v1518 = vadd.f32 %v1516, %v559
        %v1520 = vrot.slane %v1471, 1
        %v1521 = vrot.slane %v1471, 2
        %v1522 = vrot.slane %v1471, 3
        %1526 = vst.msk [vmem:[%s616 + $0x8] sm:$0x1] %vm617, %v1471
        %1527 = vst.msk [vmem:[%s616 + $0x18] sm:$0x1] %vm617, %v1520
        %1528 = vst.msk [vmem:[%s616 + $0x28] sm:$0x1] %vm617, %v1521
        %1529 = vst.msk [vmem:[%s616 + $0x38] sm:$0x1] %vm617, %v1522
        %v1531 = vrot.slane %v1518, 1
        %v1532 = vrot.slane %v1518, 2
        %v1533 = vrot.slane %v1518, 3
        %1537 = vst.msk [vmem:[%s616 + $0x9] sm:$0x1] %vm617, %v1518
        %1538 = vst.msk [vmem:[%s616 + $0x19] sm:$0x1] %vm617, %v1531
        %1539 = vst.msk [vmem:[%s616 + $0x29] sm:$0x1] %vm617, %v1532
        %1540 = vst.msk [vmem:[%s616 + $0x39] sm:$0x1] %vm617, %v1533
        %v1541 = vld [vmem:[%s305 + $0x5] sm:$0x1]
        %v1542 = vld [vmem:[%s305 + $0xd] sm:$0x1]
        %v1543 = vld [vmem:[%s305 + $0x15] sm:$0x1]
        %v1544 = vld [vmem:[%s305 + $0x1d] sm:$0x1]
        %v1545 = vld [vmem:[%s305 + $0x25] sm:$0x1]
        %v1546 = vld [vmem:[%s305 + $0x2d] sm:$0x1]
        %v1547 = vld [vmem:[%s305 + $0x35] sm:$0x1]
        %v1548 = vld [vmem:[%s305 + $0x3d] sm:$0x1]
        %v1557 = vrot.slane %v1542, 7
        %v1558 = vsel %vm396, %v1557, %v1541
        %v1559 = vrot.slane %v1543, 6
        %v1560 = vsel %vm399, %v1559, %v1558
        %v1561 = vrot.slane %v1544, 5
        %v1562 = vsel %vm402, %v1561, %v1560
        %v1563 = vrot.slane %v1545, 4
        %v1564 = vsel %vm405, %v1563, %v1562
        %v1565 = vrot.slane %v1546, 3
        %v1566 = vsel %vm408, %v1565, %v1564
        %v1567 = vrot.slane %v1547, 2
        %v1568 = vsel %vm411, %v1567, %v1566
        %v1569 = vrot.slane %v1548, 1
        %v1570 = vsel %vm414, %v1569, %v1568
        %1572 = vmatpush.msra.mxu0 0.0
        %1573 = vmatpush.msra.mxu0 0.0
        %1574 = vmatpush.msra.mxu0 0.0
        %1575 = vmatpush.msra.mxu0 0.0
        %1576 = vmatpush.msra.mxu0 0.0
        %1577 = vmatpush.msra.mxu0 0.0
        %1578 = vmatpush.msra.mxu0 0.0
        %1579 = vmatpush.msra.mxu0 0.0
        %1580 = vmatpush.msra.mxu0 0.0
        %1581 = vmatpush.msra.mxu0 0.0
        %1582 = vmatpush.msra.mxu0 0.0
        %1583 = vmatpush.msra.mxu0 0.0
        %1584 = vmatpush.msra.mxu0 0.0
        %1585 = vmatpush.msra.mxu0 0.0
        %1586 = vmatpush.msra.mxu0 0.0
        %1587 = vmatpush.msra.mxu0 %v1570
        %1588 = vmatmul.f32.gmra.mxu0 %v419
        %v1589 = vpop.f32.mrf.mxu0
        %v1590 = vadd.f32 0.0, %v1589
        %1591 = vdwg.mxu0
        %1592 = vmatpush.msra.mxu0 0.0
        %1593 = vmatpush.msra.mxu0 0.0
        %1594 = vmatpush.msra.mxu0 0.0
        %1595 = vmatpush.msra.mxu0 0.0
        %1596 = vmatpush.msra.mxu0 0.0
        %1597 = vmatpush.msra.mxu0 0.0
        %1598 = vmatpush.msra.mxu0 0.0
        %1599 = vmatpush.msra.mxu0 0.0
        %1600 = vmatpush.msra.mxu0 0.0
        %1601 = vmatpush.msra.mxu0 0.0
        %1602 = vmatpush.msra.mxu0 0.0
        %1603 = vmatpush.msra.mxu0 0.0
        %1604 = vmatpush.msra.mxu0 0.0
        %1605 = vmatpush.msra.mxu0 0.0
        %1606 = vmatpush.msra.mxu0 0.0
        %1607 = vmatpush.msra.mxu0 %v1570
        %1608 = vmatmul.f32.gmra.mxu0 %v442
        %v1609 = vpop.f32.mrf.mxu0
        %v1610 = vadd.f32 0.0, %v1609
        %1611 = vdwg.mxu0
        %1612 = vmatpush.msra.mxu0 0.0
        %1613 = vmatpush.msra.mxu0 0.0
        %1614 = vmatpush.msra.mxu0 0.0
        %1615 = vmatpush.msra.mxu0 0.0
        %1616 = vmatpush.msra.mxu0 0.0
        %1617 = vmatpush.msra.mxu0 0.0
        %1618 = vmatpush.msra.mxu0 0.0
        %1619 = vmatpush.msra.mxu0 0.0
        %1620 = vmatpush.msra.mxu0 0.0
        %1621 = vmatpush.msra.mxu0 0.0
        %1622 = vmatpush.msra.mxu0 0.0
        %1623 = vmatpush.msra.mxu0 0.0
        %1624 = vmatpush.msra.mxu0 0.0
        %1625 = vmatpush.msra.mxu0 0.0
        %1626 = vmatpush.msra.mxu0 0.0
        %1627 = vmatpush.msra.mxu0 %v1570
        %1628 = vmatmul.f32.gmra.mxu0 %v465
        %v1629 = vpop.f32.mrf.mxu0
        %v1630 = vadd.f32 0.0, %v1629
        %1631 = vdwg.mxu0
        %1632 = vmatpush.msra.mxu0 0.0
        %1633 = vmatpush.msra.mxu0 0.0
        %1634 = vmatpush.msra.mxu0 0.0
        %1635 = vmatpush.msra.mxu0 0.0
        %1636 = vmatpush.msra.mxu0 0.0
        %1637 = vmatpush.msra.mxu0 0.0
        %1638 = vmatpush.msra.mxu0 0.0
        %1639 = vmatpush.msra.mxu0 0.0
        %1640 = vmatpush.msra.mxu0 0.0
        %1641 = vmatpush.msra.mxu0 0.0
        %1642 = vmatpush.msra.mxu0 0.0
        %1643 = vmatpush.msra.mxu0 0.0
        %1644 = vmatpush.msra.mxu0 0.0
        %1645 = vmatpush.msra.mxu0 0.0
        %1646 = vmatpush.msra.mxu0 0.0
        %1647 = vmatpush.msra.mxu0 %v1570
        %1648 = vmatmul.f32.gmra.mxu0 %v488
        %v1649 = vpop.f32.mrf.mxu0
        %v1650 = vadd.f32 0.0, %v1649
        %1651 = vdwg.mxu0
        %v1653 = vsel %vm417, %v1610, 0
        %1655 = vmatpush.msra.mxu0 0.0
        %1656 = vmatpush.msra.mxu0 0.0
        %1657 = vmatpush.msra.mxu0 0.0
        %1658 = vmatpush.msra.mxu0 0.0
        %1659 = vmatpush.msra.mxu0 0.0
        %1660 = vmatpush.msra.mxu0 0.0
        %1661 = vmatpush.msra.mxu0 0.0
        %1662 = vmatpush.msra.mxu0 0.0
        %1663 = vmatpush.msra.mxu0 0.0
        %1664 = vmatpush.msra.mxu0 0.0
        %1665 = vmatpush.msra.mxu0 0.0
        %1666 = vmatpush.msra.mxu0 0.0
        %1667 = vmatpush.msra.mxu0 0.0
        %1668 = vmatpush.msra.mxu0 0.0
        %1669 = vmatpush.msra.mxu0 0.0
        %1670 = vmatpush.msra.mxu0 %v370
        %1671 = vmatmul.f32.gmra.mxu0 %v1653
        %v1672 = vpop.f32.mrf.mxu0
        %v1673 = vadd.f32 0.0, %v1672
        %1674 = vdwg.mxu0
        %v1676 = vsel %vm417, %v1590, 0
        %1678 = vmatpush.msra.mxu0 0.0
        %1679 = vmatpush.msra.mxu0 0.0
        %1680 = vmatpush.msra.mxu0 0.0
        %1681 = vmatpush.msra.mxu0 0.0
        %1682 = vmatpush.msra.mxu0 0.0
        %1683 = vmatpush.msra.mxu0 0.0
        %1684 = vmatpush.msra.mxu0 0.0
        %1685 = vmatpush.msra.mxu0 0.0
        %1686 = vmatpush.msra.mxu0 0.0
        %1687 = vmatpush.msra.mxu0 0.0
        %1688 = vmatpush.msra.mxu0 0.0
        %1689 = vmatpush.msra.mxu0 0.0
        %1690 = vmatpush.msra.mxu0 0.0
        %1691 = vmatpush.msra.mxu0 0.0
        %1692 = vmatpush.msra.mxu0 0.0
        %1693 = vmatpush.msra.mxu0 %v369
        %1694 = vmatmul.f32.gmra.mxu0 %v1676
        %v1695 = vpop.f32.mrf.mxu0
        %v1696 = vadd.f32 %v1673, %v1695
        %1697 = vdwg.mxu0
        %v1698 = vadd.f32 %v1696, %v559
        %v1700 = vsel %vm417, %v1650, 0
        %1702 = vmatpush.msra.mxu0 0.0
        %1703 = vmatpush.msra.mxu0 0.0
        %1704 = vmatpush.msra.mxu0 0.0
        %1705 = vmatpush.msra.mxu0 0.0
        %1706 = vmatpush.msra.mxu0 0.0
        %1707 = vmatpush.msra.mxu0 0.0
        %1708 = vmatpush.msra.mxu0 0.0
        %1709 = vmatpush.msra.mxu0 0.0
        %1710 = vmatpush.msra.mxu0 0.0
        %1711 = vmatpush.msra.mxu0 0.0
        %1712 = vmatpush.msra.mxu0 0.0
        %1713 = vmatpush.msra.mxu0 0.0
        %1714 = vmatpush.msra.mxu0 0.0
        %1715 = vmatpush.msra.mxu0 0.0
        %1716 = vmatpush.msra.mxu0 0.0
        %1717 = vmatpush.msra.mxu0 %v370
        %1718 = vmatmul.f32.gmra.mxu0 %v1700
        %v1719 = vpop.f32.mrf.mxu0
        %v1720 = vadd.f32 0.0, %v1719
        %1721 = vdwg.mxu0
        %v1723 = vsel %vm417, %v1630, 0
        %1725 = vmatpush.msra.mxu0 0.0
        %1726 = vmatpush.msra.mxu0 0.0
        %1727 = vmatpush.msra.mxu0 0.0
        %1728 = vmatpush.msra.mxu0 0.0
        %1729 = vmatpush.msra.mxu0 0.0
        %1730 = vmatpush.msra.mxu0 0.0
        %1731 = vmatpush.msra.mxu0 0.0
        %1732 = vmatpush.msra.mxu0 0.0
        %1733 = vmatpush.msra.mxu0 0.0
        %1734 = vmatpush.msra.mxu0 0.0
        %1735 = vmatpush.msra.mxu0 0.0
        %1736 = vmatpush.msra.mxu0 0.0
        %1737 = vmatpush.msra.mxu0 0.0
        %1738 = vmatpush.msra.mxu0 0.0
        %1739 = vmatpush.msra.mxu0 0.0
        %1740 = vmatpush.msra.mxu0 %v369
        %1741 = vmatmul.f32.gmra.mxu0 %v1723
        %v1742 = vpop.f32.mrf.mxu0
        %v1743 = vadd.f32 %v1720, %v1742
        %1744 = vdwg.mxu0
        %v1745 = vadd.f32 %v1743, %v559
        %v1747 = vrot.slane %v1698, 1
        %v1748 = vrot.slane %v1698, 2
        %v1749 = vrot.slane %v1698, 3
        %1753 = vst.msk [vmem:[%s616 + $0xa] sm:$0x1] %vm617, %v1698
        %1754 = vst.msk [vmem:[%s616 + $0x1a] sm:$0x1] %vm617, %v1747
        %1755 = vst.msk [vmem:[%s616 + $0x2a] sm:$0x1] %vm617, %v1748
        %1756 = vst.msk [vmem:[%s616 + $0x3a] sm:$0x1] %vm617, %v1749
        %v1758 = vrot.slane %v1745, 1
        %v1759 = vrot.slane %v1745, 2
        %v1760 = vrot.slane %v1745, 3
        %1764 = vst.msk [vmem:[%s616 + $0xb] sm:$0x1] %vm617, %v1745
        %1765 = vst.msk [vmem:[%s616 + $0x1b] sm:$0x1] %vm617, %v1758
        %1766 = vst.msk [vmem:[%s616 + $0x2b] sm:$0x1] %vm617, %v1759
        %1767 = vst.msk [vmem:[%s616 + $0x3b] sm:$0x1] %vm617, %v1760
        %v1768 = vld [vmem:[%s305 + $0x6] sm:$0x1]
        %v1769 = vld [vmem:[%s305 + $0xe] sm:$0x1]
        %v1770 = vld [vmem:[%s305 + $0x16] sm:$0x1]
        %v1771 = vld [vmem:[%s305 + $0x1e] sm:$0x1]
        %v1772 = vld [vmem:[%s305 + $0x26] sm:$0x1]
        %v1773 = vld [vmem:[%s305 + $0x2e] sm:$0x1]
        %v1774 = vld [vmem:[%s305 + $0x36] sm:$0x1]
        %v1775 = vld [vmem:[%s305 + $0x3e] sm:$0x1]
        %v1784 = vrot.slane %v1769, 7
        %v1785 = vsel %vm396, %v1784, %v1768
        %v1786 = vrot.slane %v1770, 6
        %v1787 = vsel %vm399, %v1786, %v1785
        %v1788 = vrot.slane %v1771, 5
        %v1789 = vsel %vm402, %v1788, %v1787
        %v1790 = vrot.slane %v1772, 4
        %v1791 = vsel %vm405, %v1790, %v1789
        %v1792 = vrot.slane %v1773, 3
        %v1793 = vsel %vm408, %v1792, %v1791
        %v1794 = vrot.slane %v1774, 2
        %v1795 = vsel %vm411, %v1794, %v1793
        %v1796 = vrot.slane %v1775, 1
        %v1797 = vsel %vm414, %v1796, %v1795
        %1799 = vmatpush.msra.mxu0 0.0
        %1800 = vmatpush.msra.mxu0 0.0
        %1801 = vmatpush.msra.mxu0 0.0
        %1802 = vmatpush.msra.mxu0 0.0
        %1803 = vmatpush.msra.mxu0 0.0
        %1804 = vmatpush.msra.mxu0 0.0
        %1805 = vmatpush.msra.mxu0 0.0
        %1806 = vmatpush.msra.mxu0 0.0
        %1807 = vmatpush.msra.mxu0 0.0
        %1808 = vmatpush.msra.mxu0 0.0
        %1809 = vmatpush.msra.mxu0 0.0
        %1810 = vmatpush.msra.mxu0 0.0
        %1811 = vmatpush.msra.mxu0 0.0
        %1812 = vmatpush.msra.mxu0 0.0
        %1813 = vmatpush.msra.mxu0 0.0
        %1814 = vmatpush.msra.mxu0 %v1797
        %1815 = vmatmul.f32.gmra.mxu0 %v419
        %v1816 = vpop.f32.mrf.mxu0
        %v1817 = vadd.f32 0.0, %v1816
        %1818 = vdwg.mxu0
        %1819 = vmatpush.msra.mxu0 0.0
        %1820 = vmatpush.msra.mxu0 0.0
        %1821 = vmatpush.msra.mxu0 0.0
        %1822 = vmatpush.msra.mxu0 0.0
        %1823 = vmatpush.msra.mxu0 0.0
        %1824 = vmatpush.msra.mxu0 0.0
        %1825 = vmatpush.msra.mxu0 0.0
        %1826 = vmatpush.msra.mxu0 0.0
        %1827 = vmatpush.msra.mxu0 0.0
        %1828 = vmatpush.msra.mxu0 0.0
        %1829 = vmatpush.msra.mxu0 0.0
        %1830 = vmatpush.msra.mxu0 0.0
        %1831 = vmatpush.msra.mxu0 0.0
        %1832 = vmatpush.msra.mxu0 0.0
        %1833 = vmatpush.msra.mxu0 0.0
        %1834 = vmatpush.msra.mxu0 %v1797
        %1835 = vmatmul.f32.gmra.mxu0 %v442
        %v1836 = vpop.f32.mrf.mxu0
        %v1837 = vadd.f32 0.0, %v1836
        %1838 = vdwg.mxu0
        %1839 = vmatpush.msra.mxu0 0.0
        %1840 = vmatpush.msra.mxu0 0.0
        %1841 = vmatpush.msra.mxu0 0.0
        %1842 = vmatpush.msra.mxu0 0.0
        %1843 = vmatpush.msra.mxu0 0.0
        %1844 = vmatpush.msra.mxu0 0.0
        %1845 = vmatpush.msra.mxu0 0.0
        %1846 = vmatpush.msra.mxu0 0.0
        %1847 = vmatpush.msra.mxu0 0.0
        %1848 = vmatpush.msra.mxu0 0.0
        %1849 = vmatpush.msra.mxu0 0.0
        %1850 = vmatpush.msra.mxu0 0.0
        %1851 = vmatpush.msra.mxu0 0.0
        %1852 = vmatpush.msra.mxu0 0.0
        %1853 = vmatpush.msra.mxu0 0.0
        %1854 = vmatpush.msra.mxu0 %v1797
        %1855 = vmatmul.f32.gmra.mxu0 %v465
        %v1856 = vpop.f32.mrf.mxu0
        %v1857 = vadd.f32 0.0, %v1856
        %1858 = vdwg.mxu0
        %1859 = vmatpush.msra.mxu0 0.0
        %1860 = vmatpush.msra.mxu0 0.0
        %1861 = vmatpush.msra.mxu0 0.0
        %1862 = vmatpush.msra.mxu0 0.0
        %1863 = vmatpush.msra.mxu0 0.0
        %1864 = vmatpush.msra.mxu0 0.0
        %1865 = vmatpush.msra.mxu0 0.0
        %1866 = vmatpush.msra.mxu0 0.0
        %1867 = vmatpush.msra.mxu0 0.0
        %1868 = vmatpush.msra.mxu0 0.0
        %1869 = vmatpush.msra.mxu0 0.0
        %1870 = vmatpush.msra.mxu0 0.0
        %1871 = vmatpush.msra.mxu0 0.0
        %1872 = vmatpush.msra.mxu0 0.0
        %1873 = vmatpush.msra.mxu0 0.0
        %1874 = vmatpush.msra.mxu0 %v1797
        %1875 = vmatmul.f32.gmra.mxu0 %v488
        %v1876 = vpop.f32.mrf.mxu0
        %v1877 = vadd.f32 0.0, %v1876
        %1878 = vdwg.mxu0
        %v1880 = vsel %vm417, %v1837, 0
        %1882 = vmatpush.msra.mxu0 0.0
        %1883 = vmatpush.msra.mxu0 0.0
        %1884 = vmatpush.msra.mxu0 0.0
        %1885 = vmatpush.msra.mxu0 0.0
        %1886 = vmatpush.msra.mxu0 0.0
        %1887 = vmatpush.msra.mxu0 0.0
        %1888 = vmatpush.msra.mxu0 0.0
        %1889 = vmatpush.msra.mxu0 0.0
        %1890 = vmatpush.msra.mxu0 0.0
        %1891 = vmatpush.msra.mxu0 0.0
        %1892 = vmatpush.msra.mxu0 0.0
        %1893 = vmatpush.msra.mxu0 0.0
        %1894 = vmatpush.msra.mxu0 0.0
        %1895 = vmatpush.msra.mxu0 0.0
        %1896 = vmatpush.msra.mxu0 0.0
        %1897 = vmatpush.msra.mxu0 %v370
        %1898 = vmatmul.f32.gmra.mxu0 %v1880
        %v1899 = vpop.f32.mrf.mxu0
        %v1900 = vadd.f32 0.0, %v1899
        %1901 = vdwg.mxu0
        %v1903 = vsel %vm417, %v1817, 0
        %1905 = vmatpush.msra.mxu0 0.0
        %1906 = vmatpush.msra.mxu0 0.0
        %1907 = vmatpush.msra.mxu0 0.0
        %1908 = vmatpush.msra.mxu0 0.0
        %1909 = vmatpush.msra.mxu0 0.0
        %1910 = vmatpush.msra.mxu0 0.0
        %1911 = vmatpush.msra.mxu0 0.0
        %1912 = vmatpush.msra.mxu0 0.0
        %1913 = vmatpush.msra.mxu0 0.0
        %1914 = vmatpush.msra.mxu0 0.0
        %1915 = vmatpush.msra.mxu0 0.0
        %1916 = vmatpush.msra.mxu0 0.0
        %1917 = vmatpush.msra.mxu0 0.0
        %1918 = vmatpush.msra.mxu0 0.0
        %1919 = vmatpush.msra.mxu0 0.0
        %1920 = vmatpush.msra.mxu0 %v369
        %1921 = vmatmul.f32.gmra.mxu0 %v1903
        %v1922 = vpop.f32.mrf.mxu0
        %v1923 = vadd.f32 %v1900, %v1922
        %1924 = vdwg.mxu0
        %v1925 = vadd.f32 %v1923, %v559
        %v1927 = vsel %vm417, %v1877, 0
        %1929 = vmatpush.msra.mxu0 0.0
        %1930 = vmatpush.msra.mxu0 0.0
        %1931 = vmatpush.msra.mxu0 0.0
        %1932 = vmatpush.msra.mxu0 0.0
        %1933 = vmatpush.msra.mxu0 0.0
        %1934 = vmatpush.msra.mxu0 0.0
        %1935 = vmatpush.msra.mxu0 0.0
        %1936 = vmatpush.msra.mxu0 0.0
        %1937 = vmatpush.msra.mxu0 0.0
        %1938 = vmatpush.msra.mxu0 0.0
        %1939 = vmatpush.msra.mxu0 0.0
        %1940 = vmatpush.msra.mxu0 0.0
        %1941 = vmatpush.msra.mxu0 0.0
        %1942 = vmatpush.msra.mxu0 0.0
        %1943 = vmatpush.msra.mxu0 0.0
        %1944 = vmatpush.msra.mxu0 %v370
        %1945 = vmatmul.f32.gmra.mxu0 %v1927
        %v1946 = vpop.f32.mrf.mxu0
        %v1947 = vadd.f32 0.0, %v1946
        %1948 = vdwg.mxu0
        %v1950 = vsel %vm417, %v1857, 0
        %1952 = vmatpush.msra.mxu0 0.0
        %1953 = vmatpush.msra.mxu0 0.0
        %1954 = vmatpush.msra.mxu0 0.0
        %1955 = vmatpush.msra.mxu0 0.0
        %1956 = vmatpush.msra.mxu0 0.0
        %1957 = vmatpush.msra.mxu0 0.0
        %1958 = vmatpush.msra.mxu0 0.0
        %1959 = vmatpush.msra.mxu0 0.0
        %1960 = vmatpush.msra.mxu0 0.0
        %1961 = vmatpush.msra.mxu0 0.0
        %1962 = vmatpush.msra.mxu0 0.0
        %1963 = vmatpush.msra.mxu0 0.0
        %1964 = vmatpush.msra.mxu0 0.0
        %1965 = vmatpush.msra.mxu0 0.0
        %1966 = vmatpush.msra.mxu0 0.0
        %1967 = vmatpush.msra.mxu0 %v369
        %1968 = vmatmul.f32.gmra.mxu0 %v1950
        %v1969 = vpop.f32.mrf.mxu0
        %v1970 = vadd.f32 %v1947, %v1969
        %1971 = vdwg.mxu0
        %v1972 = vadd.f32 %v1970, %v559
        %v1974 = vrot.slane %v1925, 1
        %v1975 = vrot.slane %v1925, 2
        %v1976 = vrot.slane %v1925, 3
        %1980 = vst.msk [vmem:[%s616 + $0xc] sm:$0x1] %vm617, %v1925
        %1981 = vst.msk [vmem:[%s616 + $0x1c] sm:$0x1] %vm617, %v1974
        %1982 = vst.msk [vmem:[%s616 + $0x2c] sm:$0x1] %vm617, %v1975
        %1983 = vst.msk [vmem:[%s616 + $0x3c] sm:$0x1] %vm617, %v1976
        %v1985 = vrot.slane %v1972, 1
        %v1986 = vrot.slane %v1972, 2
        %v1987 = vrot.slane %v1972, 3
        %1991 = vst.msk [vmem:[%s616 + $0xd] sm:$0x1] %vm617, %v1972
        %1992 = vst.msk [vmem:[%s616 + $0x1d] sm:$0x1] %vm617, %v1985
        %1993 = vst.msk [vmem:[%s616 + $0x2d] sm:$0x1] %vm617, %v1986
        %1994 = vst.msk [vmem:[%s616 + $0x3d] sm:$0x1] %vm617, %v1987
        %v1995 = vld [vmem:[%s305 + $0x7] sm:$0x1]
        %v1996 = vld [vmem:[%s305 + $0xf] sm:$0x1]
        %v1997 = vld [vmem:[%s305 + $0x17] sm:$0x1]
        %v1998 = vld [vmem:[%s305 + $0x1f] sm:$0x1]
        %v1999 = vld [vmem:[%s305 + $0x27] sm:$0x1]
        %v2000 = vld [vmem:[%s305 + $0x2f] sm:$0x1]
        %v2001 = vld [vmem:[%s305 + $0x37] sm:$0x1]
        %v2002 = vld [vmem:[%s305 + $0x3f] sm:$0x1]
        %v2011 = vrot.slane %v1996, 7
        %v2012 = vsel %vm396, %v2011, %v1995
        %v2013 = vrot.slane %v1997, 6
        %v2014 = vsel %vm399, %v2013, %v2012
        %v2015 = vrot.slane %v1998, 5
        %v2016 = vsel %vm402, %v2015, %v2014
        %v2017 = vrot.slane %v1999, 4
        %v2018 = vsel %vm405, %v2017, %v2016
        %v2019 = vrot.slane %v2000, 3
        %v2020 = vsel %vm408, %v2019, %v2018
        %v2021 = vrot.slane %v2001, 2
        %v2022 = vsel %vm411, %v2021, %v2020
        %v2023 = vrot.slane %v2002, 1
        %v2024 = vsel %vm414, %v2023, %v2022
        %2026 = vmatpush.msra.mxu0 0.0
        %2027 = vmatpush.msra.mxu0 0.0
        %2028 = vmatpush.msra.mxu0 0.0
        %2029 = vmatpush.msra.mxu0 0.0
        %2030 = vmatpush.msra.mxu0 0.0
        %2031 = vmatpush.msra.mxu0 0.0
        %2032 = vmatpush.msra.mxu0 0.0
        %2033 = vmatpush.msra.mxu0 0.0
        %2034 = vmatpush.msra.mxu0 0.0
        %2035 = vmatpush.msra.mxu0 0.0
        %2036 = vmatpush.msra.mxu0 0.0
        %2037 = vmatpush.msra.mxu0 0.0
        %2038 = vmatpush.msra.mxu0 0.0
        %2039 = vmatpush.msra.mxu0 0.0
        %2040 = vmatpush.msra.mxu0 0.0
        %2041 = vmatpush.msra.mxu0 %v2024
        %2042 = vmatmul.f32.gmra.mxu0 %v419
        %v2043 = vpop.f32.mrf.mxu0
        %v2044 = vadd.f32 0.0, %v2043
        %2045 = vdwg.mxu0
        %2046 = vmatpush.msra.mxu0 0.0
        %2047 = vmatpush.msra.mxu0 0.0
        %2048 = vmatpush.msra.mxu0 0.0
        %2049 = vmatpush.msra.mxu0 0.0
        %2050 = vmatpush.msra.mxu0 0.0
        %2051 = vmatpush.msra.mxu0 0.0
        %2052 = vmatpush.msra.mxu0 0.0
        %2053 = vmatpush.msra.mxu0 0.0
        %2054 = vmatpush.msra.mxu0 0.0
        %2055 = vmatpush.msra.mxu0 0.0
        %2056 = vmatpush.msra.mxu0 0.0
        %2057 = vmatpush.msra.mxu0 0.0
        %2058 = vmatpush.msra.mxu0 0.0
        %2059 = vmatpush.msra.mxu0 0.0
        %2060 = vmatpush.msra.mxu0 0.0
        %2061 = vmatpush.msra.mxu0 %v2024
        %2062 = vmatmul.f32.gmra.mxu0 %v442
        %v2063 = vpop.f32.mrf.mxu0
        %v2064 = vadd.f32 0.0, %v2063
        %2065 = vdwg.mxu0
        %2066 = vmatpush.msra.mxu0 0.0
        %2067 = vmatpush.msra.mxu0 0.0
        %2068 = vmatpush.msra.mxu0 0.0
        %2069 = vmatpush.msra.mxu0 0.0
        %2070 = vmatpush.msra.mxu0 0.0
        %2071 = vmatpush.msra.mxu0 0.0
        %2072 = vmatpush.msra.mxu0 0.0
        %2073 = vmatpush.msra.mxu0 0.0
        %2074 = vmatpush.msra.mxu0 0.0
        %2075 = vmatpush.msra.mxu0 0.0
        %2076 = vmatpush.msra.mxu0 0.0
        %2077 = vmatpush.msra.mxu0 0.0
        %2078 = vmatpush.msra.mxu0 0.0
        %2079 = vmatpush.msra.mxu0 0.0
        %2080 = vmatpush.msra.mxu0 0.0
        %2081 = vmatpush.msra.mxu0 %v2024
        %2082 = vmatmul.f32.gmra.mxu0 %v465
        %v2083 = vpop.f32.mrf.mxu0
        %v2084 = vadd.f32 0.0, %v2083
        %2085 = vdwg.mxu0
        %2086 = vmatpush.msra.mxu0 0.0
        %2087 = vmatpush.msra.mxu0 0.0
        %2088 = vmatpush.msra.mxu0 0.0
        %2089 = vmatpush.msra.mxu0 0.0
        %2090 = vmatpush.msra.mxu0 0.0
        %2091 = vmatpush.msra.mxu0 0.0
        %2092 = vmatpush.msra.mxu0 0.0
        %2093 = vmatpush.msra.mxu0 0.0
        %2094 = vmatpush.msra.mxu0 0.0
        %2095 = vmatpush.msra.mxu0 0.0
        %2096 = vmatpush.msra.mxu0 0.0
        %2097 = vmatpush.msra.mxu0 0.0
        %2098 = vmatpush.msra.mxu0 0.0
        %2099 = vmatpush.msra.mxu0 0.0
        %2100 = vmatpush.msra.mxu0 0.0
        %2101 = vmatpush.msra.mxu0 %v2024
        %2102 = vmatmul.f32.gmra.mxu0 %v488
        %v2103 = vpop.f32.mrf.mxu0
        %v2104 = vadd.f32 0.0, %v2103
        %2105 = vdwg.mxu0
        %v2107 = vsel %vm417, %v2064, 0
        %2109 = vmatpush.msra.mxu0 0.0
        %2110 = vmatpush.msra.mxu0 0.0
        %2111 = vmatpush.msra.mxu0 0.0
        %2112 = vmatpush.msra.mxu0 0.0
        %2113 = vmatpush.msra.mxu0 0.0
        %2114 = vmatpush.msra.mxu0 0.0
        %2115 = vmatpush.msra.mxu0 0.0
        %2116 = vmatpush.msra.mxu0 0.0
        %2117 = vmatpush.msra.mxu0 0.0
        %2118 = vmatpush.msra.mxu0 0.0
        %2119 = vmatpush.msra.mxu0 0.0
        %2120 = vmatpush.msra.mxu0 0.0
        %2121 = vmatpush.msra.mxu0 0.0
        %2122 = vmatpush.msra.mxu0 0.0
        %2123 = vmatpush.msra.mxu0 0.0
        %2124 = vmatpush.msra.mxu0 %v370
        %2125 = vmatmul.f32.gmra.mxu0 %v2107
        %v2126 = vpop.f32.mrf.mxu0
        %v2127 = vadd.f32 0.0, %v2126
        %2128 = vdwg.mxu0
        %v2130 = vsel %vm417, %v2044, 0
        %2132 = vmatpush.msra.mxu0 0.0
        %2133 = vmatpush.msra.mxu0 0.0
        %2134 = vmatpush.msra.mxu0 0.0
        %2135 = vmatpush.msra.mxu0 0.0
        %2136 = vmatpush.msra.mxu0 0.0
        %2137 = vmatpush.msra.mxu0 0.0
        %2138 = vmatpush.msra.mxu0 0.0
        %2139 = vmatpush.msra.mxu0 0.0
        %2140 = vmatpush.msra.mxu0 0.0
        %2141 = vmatpush.msra.mxu0 0.0
        %2142 = vmatpush.msra.mxu0 0.0
        %2143 = vmatpush.msra.mxu0 0.0
        %2144 = vmatpush.msra.mxu0 0.0
        %2145 = vmatpush.msra.mxu0 0.0
        %2146 = vmatpush.msra.mxu0 0.0
        %2147 = vmatpush.msra.mxu0 %v369
        %2148 = vmatmul.f32.gmra.mxu0 %v2130
        %v2149 = vpop.f32.mrf.mxu0
        %v2150 = vadd.f32 %v2127, %v2149
        %2151 = vdwg.mxu0
        %v2152 = vadd.f32 %v2150, %v559
        %v2154 = vsel %vm417, %v2104, 0
        %2156 = vmatpush.msra.mxu0 0.0
        %2157 = vmatpush.msra.mxu0 0.0
        %2158 = vmatpush.msra.mxu0 0.0
        %2159 = vmatpush.msra.mxu0 0.0
        %2160 = vmatpush.msra.mxu0 0.0
        %2161 = vmatpush.msra.mxu0 0.0
        %2162 = vmatpush.msra.mxu0 0.0
        %2163 = vmatpush.msra.mxu0 0.0
        %2164 = vmatpush.msra.mxu0 0.0
        %2165 = vmatpush.msra.mxu0 0.0
        %2166 = vmatpush.msra.mxu0 0.0
        %2167 = vmatpush.msra.mxu0 0.0
        %2168 = vmatpush.msra.mxu0 0.0
        %2169 = vmatpush.msra.mxu0 0.0
        %2170 = vmatpush.msra.mxu0 0.0
        %2171 = vmatpush.msra.mxu0 %v370
        %2172 = vmatmul.f32.gmra.mxu0 %v2154
        %v2173 = vpop.f32.mrf.mxu0
        %v2174 = vadd.f32 0.0, %v2173
        %2175 = vdwg.mxu0
        %v2177 = vsel %vm417, %v2084, 0
        %2179 = vmatpush.msra.mxu0 0.0
        %2180 = vmatpush.msra.mxu0 0.0
        %2181 = vmatpush.msra.mxu0 0.0
        %2182 = vmatpush.msra.mxu0 0.0
        %2183 = vmatpush.msra.mxu0 0.0
        %2184 = vmatpush.msra.mxu0 0.0
        %2185 = vmatpush.msra.mxu0 0.0
        %2186 = vmatpush.msra.mxu0 0.0
        %2187 = vmatpush.msra.mxu0 0.0
        %2188 = vmatpush.msra.mxu0 0.0
        %2189 = vmatpush.msra.mxu0 0.0
        %2190 = vmatpush.msra.mxu0 0.0
        %2191 = vmatpush.msra.mxu0 0.0
        %2192 = vmatpush.msra.mxu0 0.0
        %2193 = vmatpush.msra.mxu0 0.0
        %2194 = vmatpush.msra.mxu0 %v369
        %2195 = vmatmul.f32.gmra.mxu0 %v2177
        %v2196 = vpop.f32.mrf.mxu0
        %v2197 = vadd.f32 %v2174, %v2196
        %2198 = vdwg.mxu0
        %v2199 = vadd.f32 %v2197, %v559
        %v2201 = vrot.slane %v2152, 1
        %v2202 = vrot.slane %v2152, 2
        %v2203 = vrot.slane %v2152, 3
        %2207 = vst.msk [vmem:[%s616 + $0xe] sm:$0x1] %vm617, %v2152
        %2208 = vst.msk [vmem:[%s616 + $0x1e] sm:$0x1] %vm617, %v2201
        %2209 = vst.msk [vmem:[%s616 + $0x2e] sm:$0x1] %vm617, %v2202
        %2210 = vst.msk [vmem:[%s616 + $0x3e] sm:$0x1] %vm617, %v2203
        %v2212 = vrot.slane %v2199, 1
        %v2213 = vrot.slane %v2199, 2
        %v2214 = vrot.slane %v2199, 3
        %2218 = vst.msk [vmem:[%s616 + $0xf] sm:$0x1] %vm617, %v2199
        %2219 = vst.msk [vmem:[%s616 + $0x1f] sm:$0x1] %vm617, %v2212
        %2220 = vst.msk [vmem:[%s616 + $0x2f] sm:$0x1] %vm617, %v2213
        %2221 = vst.msk [vmem:[%s616 + $0x3f] sm:$0x1] %vm617, %v2214
        %s2222 = sand.u32 %s201, 1
        %s2223 = scalar_lea.sflag [#allocation4], %s2222
        %s2224 = sand.u32 %s201, 1
        %s2225 = smul.addr %s2224, 128
        %s2226 = scalar_lea.vmem [#allocation7], %s2225
        // Predicated region
        $region53: #{up_concat.1} parent=43 // pred_check
          %p2227 = pneg %p211
        $region54: #{up_concat.1} parent=43 // pred_check_branch
          %2229 = sbr.rel (%p2227) target = $region56
        $region55: #{up_concat.1} parent=43 // pred_region
          %s2230 = smul.u32 2, %s32
          %2232 = vsyncadd %s2223, 0
          %s2233 = sadd.s32 %s33, %s2230
          %s2234 = smul.addr %s31, 16
          %s2235 = sadd.s32 %s2233, %s2234
          %s2236 = smul.addr %s2235, 8
          %s2237 = scalar_lea.hbm %s6, %s2236
          %s2238 = sshll.u32 %s2226, 4
          %s2239 = int_to_ptr.vmem [resolvable:$true] %s2238
          %s2240 = sshll.u32 %s2237, 4
          %s2241 = int_to_ptr.hbm [resolvable:$true] %s2240
          %2246 = dma.vmem_to_hbm [thread:$0]  %s2239, 2048, %s2241, %s2223, 128, 128, 8
        $region56: #{up_concat.1} parent=43 // pred_fallthru
          _
      $region44: #{up_concat.1} parent=5 // pred_fallthru
        _
      %p2247 = scmp.le.s32.totalorder 2, %s21
      // Predicated region
      $region57: #{up_concat.1} parent=5 // pred_check
        %p2248 = pneg %p2247
      $region58: #{up_concat.1} parent=5 // pred_check_branch
        %2250 = sbr.rel (%p2248) target = $region60
      $region59: #{up_concat.1} parent=5 // pred_region
        %s2251 = ssub.s32 %s21, 2
        // Predicated region
        $region61: #{up_concat.1} parent=59 // pred_check
          %p2252 = pneg %p217
        $region62: #{up_concat.1} parent=59 // pred_check_branch
          %2254 = sbr.rel (%p2252) target = $region64
        $region63: #{up_concat.1} parent=59 // pred_region
          %s2255 = sand.u32 %s202, 1
          %s2256 = scalar_lea.sflag [#allocation4], %s2255
          %s2257 = sand.u32 %s202, 1
          %s2258 = smul.addr %s2257, 128
          %s2259 = scalar_lea.vmem [#allocation7], %s2258
          %2261 = dma.done %s2256, 2048
        $region64: #{up_concat.1} parent=59 // pred_fallthru
          _
      $region60: #{up_concat.1} parent=5 // pred_fallthru
        _
    $region6: #{up_concat.1} parent=1 // loop_footer
      %s25 = sadd.s32 1, %s21
    $region7: #{up_concat.1} parent=1 // loop_footer_branch
      %20 = sbr.rel target = $region3
    $region8: #{up_concat.1} parent=1 // loop_exit
      _
    %2262 = vsyncpa [#allocation3], 1
    %s2263 = scalar_lea.sflag [#allocation3], 1
    %2264 = vsyncpa %s2263, 1
    %2265 = vsyncpa [#allocation6], 1
    %s2266 = scalar_lea.sflag [#allocation6], 1
    %2267 = vsyncpa %s2266, 1
    %2268 = vsyncpa [#allocation4], 1
    %s2269 = scalar_lea.sflag [#allocation4], 1
    %2270 = vsyncpa %s2269, 1

</llo_original>
